<compile_context>
chip_gen: v6e
topology: v6e:2x2x1
jax: 0.10.0
libtpu: 0.0.40
codegen_flags: <defaults>
</compile_context>

<pallas_src>
import jax
import jax.numpy as jnp
from jax.experimental import pallas as pl
from jax.experimental.pallas import tpu as pltpu

_LANE = 128
_SUBLANE = 8


def _round_up(n, m):
    return ((n + m - 1) // m) * m


def _pad2d(a, rows, cols):
    pr, pc = rows - a.shape[0], cols - a.shape[1]
    if pr == 0 and pc == 0:
        return a
    return jnp.pad(a, ((0, pr), (0, pc)))


def _vmem_capacity_bytes():
    """Physical VMEM per TensorCore; conservative fallback if the query fails."""
    try:
        return int(pltpu.get_tpu_info().vmem_capacity_bytes)
    except Exception:
        return 64 * 1024 * 1024  # v7x per-TC size (the most restrictive)


def _pick_h2_tile(h2p, max_tile):
    """Largest multiple of 128 that divides h2p and is <= max_tile (min 128)."""
    m = h2p // _LANE
    best = 1
    for k in range(1, m + 1):
        if m % k == 0 and k * _LANE <= max_tile:
            best = k
    return best * _LANE


def _sae_kernel(x_ref, w1_ref, b1_ref, w2_ref, b2_ref, w3_ref, b3_ref,
                w4_ref, b4_ref, dec_ref, l1_ref, h1_scr, acc_scr, l1_scr):
    """Batch tile i, streamed hidden (8*D) column block j of the SAE forward."""
    j = pl.program_id(1)
    cdt = w1_ref.dtype  # MXU operand dtype (f32, or bf16 on any generation)

    # --- once per batch tile (j == 0): encoder layer 1 + scratch init ------
    @pl.when(j == 0)
    def _():
        x = x_ref[...].astype(cdt)
        h1 = jnp.dot(x, w1_ref[...], preferred_element_type=jnp.float32)
        h1_scr[...] = jnp.maximum(h1 + b1_ref[...], 0.0)
        acc_scr[...] = jnp.zeros_like(acc_scr)
        l1_scr[...] = jnp.zeros_like(l1_scr)

    # --- streamed hidden block j: enc columns, L1 partial, enc @ w3 --------
    h1 = h1_scr[...].astype(cdt)
    enc_j = jnp.dot(h1, w2_ref[...],
                    preferred_element_type=jnp.float32) + b2_ref[...]
    # L1 taken from the f32 enc (before any bf16 re-rounding for the MXU).
    l1_scr[...] += jnp.sum(jnp.abs(enc_j), axis=-1, keepdims=True)
    acc_scr[...] += jnp.dot(enc_j.astype(cdt), w3_ref[...],
                            preferred_element_type=jnp.float32)

    # --- once per batch tile (j == last): decoder bias / ReLU / layer 2 ----
    @pl.when(j == pl.num_programs(1) - 1)
    def _():
        h2 = jnp.maximum(acc_scr[...] + b3_ref[...], 0.0)
        dec = jnp.dot(h2.astype(cdt), w4_ref[...],
                      preferred_element_type=jnp.float32) + b4_ref[...]
        dec_ref[...] = dec.astype(dec_ref.dtype)
        l1_ref[...] = l1_scr[...]


def sparse_autoencoder_forward(x, params, l1_penalty=0.001, max_h2_tile=512):
    """Pallas forward. Returns (decoded, l1_loss) matching the PyTorch module."""
    w1, b1, w2, b2, w3, b3, w4, b4 = params
    batch, in_dim = x.shape
    h1_dim = w1.shape[1]   # input_dim * 4
    h2_dim = w2.shape[1]   # input_dim * 8
    pbytes = jnp.dtype(w1.dtype).itemsize
    xbytes = jnp.dtype(x.dtype).itemsize

    # Padded feature sizes: the streamed x fan-in only to a sublane multiple,
    # everything that is stored / lane-reduced stays lane-dense (128).
    din_p = _round_up(in_dim, _SUBLANE)
    dp = _round_up(in_dim, _LANE)
    h1p = _round_up(h1_dim, _LANE)
    h2p = _round_up(h2_dim, _LANE)

    vmem_cap = _vmem_capacity_bytes()
    vmem_budget = int(0.9 * vmem_cap)

    # Batch tile: keep >=2 grid tiles whenever batch >= 256 so the "parallel"
    # axis occupies both v7x TensorCores; 512-row tiles only where VMEM is
    # plentiful (v5e / v6e, 128 MiB).
    tm_cap = 512 if vmem_cap > 96 * 1024 * 1024 else 256
    tm = 128
    for cand in (256, 512):
        if cand <= tm_cap and batch >= 2 * cand:
            tm = cand

    def vmem_need(tm_, th2_):
        resident = (din_p * h1p + 2 * h1p + h1p * dp + dp) * pbytes     # w1,b1,b3,w4,b4 (x1)
        streamed = 2 * (h1p * th2_ + th2_ + th2_ * h1p) * pbytes        # w2,b2,w3     (x2)
        io = 2 * (tm_ * din_p * xbytes + tm_ * dp * xbytes + tm_ * 4)   # x, dec, l1   (x2)
        scratch = (2 * tm_ * h1p + tm_) * 4                             # h1, acc, l1  (f32)
        return resident + streamed + io + scratch

    th2 = _pick_h2_tile(h2p, max_h2_tile)
    while vmem_need(tm, th2) > vmem_budget and (th2 > _LANE or tm > 128):
        if th2 > _LANE:
            th2 = _pick_h2_tile(h2p, th2 // 2)
        else:
            tm //= 2
    vmem_limit = min(max(int(1.5 * vmem_need(tm, th2)) + (4 << 20), 16 << 20),
                     vmem_budget)

    b_pad = _round_up(batch, tm)
    n_btiles = b_pad // tm
    n_h2tiles = h2p // th2

    xp = _pad2d(x, b_pad, din_p)
    w1p, b1p = _pad2d(w1, din_p, h1p), _pad2d(b1, 1, h1p)
    w2p, b2p = _pad2d(w2, h1p, h2p), _pad2d(b2, 1, h2p)
    w3p, b3p = _pad2d(w3, h2p, h1p), _pad2d(b3, 1, h1p)
    w4p, b4p = _pad2d(w4, h1p, dp), _pad2d(b4, 1, dp)

    def resident(shape):
        # Same block every grid step -> fetched once and VMEM-resident;
        # single-buffered so it doesn't pay 2x VMEM for a buffer that never
        # rotates.
        return pl.BlockSpec(shape, lambda i, j: (0, 0),
                            pipeline_mode=pl.Buffered(1))

    flops = 2 * b_pad * (din_p * h1p + h1p * h2p + h2p * h1p + h1p * dp)
    bytes_accessed = (xp.size * xbytes + b_pad * dp * xbytes + b_pad * 4
                      + (w1p.size + b1p.size + w2p.size + b2p.size
                         + w3p.size + b3p.size + w4p.size + b4p.size) * pbytes)

    decoded_p, l1_rows = pl.pallas_call(
        _sae_kernel,
        out_shape=(
            jax.ShapeDtypeStruct((b_pad, dp), x.dtype),
            jax.ShapeDtypeStruct((b_pad, 1), jnp.float32),
        ),
        grid=(n_btiles, n_h2tiles),
        in_specs=[
            pl.BlockSpec((tm, din_p), lambda i, j: (i, 0)),        # x tile
            resident((din_p, h1p)), resident((1, h1p)),            # w1, b1 (resident)
            pl.BlockSpec((h1p, th2), lambda i, j: (0, j)),         # w2 col block (streamed)
            pl.BlockSpec((1, th2), lambda i, j: (0, j)),           # b2 block     (streamed)
            pl.BlockSpec((th2, h1p), lambda i, j: (j, 0)),         # w3 row block (streamed)
            resident((1, h1p)),                                    # b3 (resident)
            resident((h1p, dp)), resident((1, dp)),                # w4, b4 (resident)
        ],
        out_specs=(
            pl.BlockSpec((tm, dp), lambda i, j: (i, 0)),           # decoded (lane-dense)
            pl.BlockSpec((tm, 1), lambda i, j: (i, 0)),            # per-row |enc| sums
        ),
        scratch_shapes=[
            pltpu.VMEM((tm, h1p), jnp.float32),   # h1 (post-ReLU), reused across j
            pltpu.VMEM((tm, h1p), jnp.float32),   # enc @ w3 accumulator
            pltpu.VMEM((tm, 1), jnp.float32),     # per-row L1 accumulator
        ],
        compiler_params=pltpu.CompilerParams(
            dimension_semantics=("parallel", "arbitrary"),
            vmem_limit_bytes=vmem_limit,
        ),
        cost_estimate=pl.CostEstimate(flops=flops, transcendentals=0,
                                      bytes_accessed=bytes_accessed),
        # TODO(synk): optional v7x-only fp8 operands for the big w2/w3 dots
        # (halves their VMEM/DMA again); gate behind a flag and re-validate.
    )(xp, w1p, b1p, w2p, b2p, w3p, b3p, w4p, b4p)

    decoded = decoded_p[:batch, :in_dim]
    # Final scale outside the kernel: no Mosaic recompile when l1_penalty
    # changes, and padded batch rows are excluded before the reduce.
    l1_loss = jnp.sum(l1_rows[:batch, 0]) * (l1_penalty / batch)
    return decoded, l1_loss


def init_params(key, input_dim, dtype=jnp.float32):
    """PyTorch-Linear-style init; weights stored as (fan_in, fan_out)."""
    dims = [
        (input_dim, input_dim * 4),      # encoder Linear 1
        (input_dim * 4, input_dim * 8),  # encoder Linear 2
        (input_dim * 8, input_dim * 4),  # decoder Linear 1
        (input_dim * 4, input_dim),      # decoder Linear 2
    ]
    params = []
    for (fan_in, fan_out) in dims:
        key, kw, kb = jax.random.split(key, 3)
        bound = 1.0 / (fan_in ** 0.5)
        w = jax.random.uniform(kw, (fan_in, fan_out), dtype, -bound, bound)
        b = jax.random.uniform(kb, (1, fan_out), dtype, -bound, bound)
        params.extend([w, b])
    return tuple(params)


def reference_forward(x, params, l1_penalty=0.001):
    w1, b1, w2, b2, w3, b3, w4, b4 = params
    h1 = jnp.maximum(x @ w1 + b1, 0.0)
    enc = h1 @ w2 + b2
    l1 = jnp.sum(jnp.abs(enc)) * l1_penalty / x.shape[0]
    h2 = jnp.maximum(enc @ w3 + b3, 0.0)
    dec = h2 @ w4 + b4
    return dec, l1


if __name__ == "__main__":
    input_dim = 32
    batch = 200  # not a multiple of 128 -> exercises batch padding + 2 batch tiles

    key = jax.random.PRNGKey(0)
    key, kx = jax.random.split(key)
    x = jax.random.normal(kx, (batch, input_dim), jnp.float32)
    params = init_params(key, input_dim)

    ref_dec, ref_l1 = reference_forward(x, params, l1_penalty=0.001)

    # f32 path; max_h2_tile=128 forces 2 streamed hidden blocks (h2p = 256) so
    # the accumulation path is exercised even at this small size.
    decoded, l1_loss = sparse_autoencoder_forward(x, params, l1_penalty=0.001,
                                                  max_h2_tile=128)
    decoded = jax.block_until_ready(decoded)
    l1_loss = jax.block_until_ready(l1_loss)
    assert jnp.allclose(decoded, ref_dec, atol=1e-4, rtol=1e-4), "f32 decoded mismatch"
    assert jnp.allclose(l1_loss, ref_l1, atol=1e-4, rtol=1e-4), "f32 l1 mismatch"

    # Default hidden tiling (single streamed block at this size).
    decoded2, l1_loss2 = sparse_autoencoder_forward(x, params, l1_penalty=0.001)
    decoded2 = jax.block_until_ready(decoded2)
    assert jnp.allclose(decoded2, ref_dec, atol=1e-4, rtol=1e-4), \
        "f32 decoded mismatch (single h2 block)"
    assert jnp.allclose(l1_loss2, ref_l1, atol=1e-4, rtol=1e-4), \
        "f32 l1 mismatch (single h2 block)"

    # bf16 MXU-operand path (recommended on v5e/v6e/v7x): f32 accumulation and
    # f32 bias / ReLU / L1 math stay inside the kernel.
    params_bf = tuple(p.astype(jnp.bfloat16) for p in params)
    x_bf = x.astype(jnp.bfloat16)
    dec_bf, l1_bf = sparse_autoencoder_forward(x_bf, params_bf, l1_penalty=0.001,
                                               max_h2_tile=128)
    dec_bf = jax.block_until_ready(dec_bf)
    l1_bf = jax.block_until_ready(l1_bf)
    assert jnp.allclose(dec_bf.astype(jnp.float32), ref_dec, atol=7e-2, rtol=7e-2), \
        "bf16 decoded mismatch"
    assert jnp.allclose(jnp.float32(l1_bf), ref_l1, atol=7e-2, rtol=7e-2), \
        "bf16 l1 mismatch"

    print("KERNEL_OK")
</pallas_src>

<mosaic_0001>
module attributes {stable_mosaic.version = 11 : i64} {
  func.func @_sae_kernel(%arg0: i32, %arg1: i32, %arg2: memref<128x32xf32, #tpu.memory_space<vmem>>, %arg3: memref<32x128xf32, #tpu.memory_space<vmem>>, %arg4: memref<1x128xf32, #tpu.memory_space<vmem>>, %arg5: memref<128x128xf32, #tpu.memory_space<vmem>>, %arg6: memref<1x128xf32, #tpu.memory_space<vmem>>, %arg7: memref<128x128xf32, #tpu.memory_space<vmem>>, %arg8: memref<1x128xf32, #tpu.memory_space<vmem>>, %arg9: memref<128x128xf32, #tpu.memory_space<vmem>>, %arg10: memref<1x128xf32, #tpu.memory_space<vmem>>, %arg11: memref<128x128xf32, #tpu.memory_space<vmem>>, %arg12: memref<128x1xf32, #tpu.memory_space<vmem>>, %arg13: memref<128x128xf32, #tpu.memory_space<vmem>>, %arg14: memref<128x128xf32, #tpu.memory_space<vmem>>, %arg15: memref<128x1xf32, #tpu.memory_space<vmem>>) attributes {dimension_semantics = [#tpu.dimension_semantics<parallel>, #tpu.dimension_semantics<arbitrary>], iteration_bounds = array<i64: 2, 2>, scalar_prefetch = 0 : i64, scratch_operands = 3 : i64, tpu.core_type = #tpu.core_type<tc>, window_params = [{transform_indices = @transform_0, window_bounds = array<i64: 128, 32>}, {pipeline_mode = #tpu.pipeline_mode<synchronous>, transform_indices = @transform_1, window_bounds = array<i64: 32, 128>}, {pipeline_mode = #tpu.pipeline_mode<synchronous>, transform_indices = @transform_2, window_bounds = array<i64: 1, 128>}, {transform_indices = @transform_3, window_bounds = array<i64: 128, 128>}, {transform_indices = @transform_4, window_bounds = array<i64: 1, 128>}, {transform_indices = @transform_5, window_bounds = array<i64: 128, 128>}, {pipeline_mode = #tpu.pipeline_mode<synchronous>, transform_indices = @transform_6, window_bounds = array<i64: 1, 128>}, {pipeline_mode = #tpu.pipeline_mode<synchronous>, transform_indices = @transform_7, window_bounds = array<i64: 128, 128>}, {pipeline_mode = #tpu.pipeline_mode<synchronous>, transform_indices = @transform_8, window_bounds = array<i64: 1, 128>}, {transform_indices = @transform_9, window_bounds = array<i64: 128, 128>}, {transform_indices = @transform_10, window_bounds = array<i64: 128, 1>}]} {
    %c0_i32 = arith.constant 0 : i32
    %0 = arith.cmpi eq, %arg1, %c0_i32 : i32
    %1 = arith.extui %0 : i1 to i32
    %c0_i32_0 = arith.constant 0 : i32
    %2 = arith.cmpi ne, %1, %c0_i32_0 : i32
    scf.if %2 {
      %c0_19 = arith.constant 0 : index
      %c0_20 = arith.constant 0 : index
      %23 = vector.load %arg2[%c0_19, %c0_20] : memref<128x32xf32, #tpu.memory_space<vmem>>, vector<128x32xf32>
      %c0_21 = arith.constant 0 : index
      %c0_22 = arith.constant 0 : index
      %24 = vector.load %arg3[%c0_21, %c0_22] : memref<32x128xf32, #tpu.memory_space<vmem>>, vector<32x128xf32>
      %cst_23 = arith.constant dense<0.000000e+00> : vector<128x128xf32>
      %25 = tpu.matmul %23, %24, %cst_23 {dimension_numbers = #tpu.dot_dimension_numbers<[1], [0], [0], [1], [0, 0, 1, 1], [], []>} : vector<128x32xf32>, vector<32x128xf32>, vector<128x128xf32> -> vector<128x128xf32>
      %c0_24 = arith.constant 0 : index
      %c0_25 = arith.constant 0 : index
      %26 = vector.load %arg4[%c0_24, %c0_25] : memref<1x128xf32, #tpu.memory_space<vmem>>, vector<1x128xf32>
      %27 = vector.broadcast %26 : vector<1x128xf32> to vector<128x128xf32>
      %28 = arith.addf %25, %27 : vector<128x128xf32>
      %cst_26 = arith.constant 0.000000e+00 : f32
      %29 = vector.broadcast %cst_26 : f32 to vector<128x128xf32>
      %30 = arith.maximumf %28, %29 : vector<128x128xf32>
      %c0_27 = arith.constant 0 : index
      %c0_28 = arith.constant 0 : index
      %31 = vector.load %arg13[%c0_27, %c0_28] : memref<128x128xf32, #tpu.memory_space<vmem>>, vector<128x128xf32>
      tpu.vector_store %arg13[%c0_27, %c0_28], %30 {strides = array<i32>} : memref<128x128xf32, #tpu.memory_space<vmem>>, vector<128x128xf32>,
      %cst_29 = arith.constant 0.000000e+00 : f32
      %32 = vector.broadcast %cst_29 : f32 to vector<128x128xf32>
      %c0_30 = arith.constant 0 : index
      %c0_31 = arith.constant 0 : index
      %33 = vector.load %arg14[%c0_30, %c0_31] : memref<128x128xf32, #tpu.memory_space<vmem>>, vector<128x128xf32>
      tpu.vector_store %arg14[%c0_30, %c0_31], %32 {strides = array<i32>} : memref<128x128xf32, #tpu.memory_space<vmem>>, vector<128x128xf32>,
      %cst_32 = arith.constant 0.000000e+00 : f32
      %34 = vector.broadcast %cst_32 : f32 to vector<128x1xf32>
      %c0_33 = arith.constant 0 : index
      %c0_34 = arith.constant 0 : index
      %35 = vector.load %arg15[%c0_33, %c0_34] : memref<128x1xf32, #tpu.memory_space<vmem>>, vector<128x1xf32>
      tpu.vector_store %arg15[%c0_33, %c0_34], %34 {strides = array<i32>} : memref<128x1xf32, #tpu.memory_space<vmem>>, vector<128x1xf32>,
    } else {
    }
    %c0 = arith.constant 0 : index
    %c0_1 = arith.constant 0 : index
    %3 = vector.load %arg13[%c0, %c0_1] : memref<128x128xf32, #tpu.memory_space<vmem>>, vector<128x128xf32>
    %c0_2 = arith.constant 0 : index
    %c0_3 = arith.constant 0 : index
    %4 = vector.load %arg5[%c0_2, %c0_3] : memref<128x128xf32, #tpu.memory_space<vmem>>, vector<128x128xf32>
    %cst = arith.constant dense<0.000000e+00> : vector<128x128xf32>
    %5 = tpu.matmul %3, %4, %cst {dimension_numbers = #tpu.dot_dimension_numbers<[1], [0], [0], [1], [0, 0, 1, 1], [], []>} : vector<128x128xf32>, vector<128x128xf32>, vector<128x128xf32> -> vector<128x128xf32>
    %c0_4 = arith.constant 0 : index
    %c0_5 = arith.constant 0 : index
    %6 = vector.load %arg6[%c0_4, %c0_5] : memref<1x128xf32, #tpu.memory_space<vmem>>, vector<1x128xf32>
    %7 = vector.broadcast %6 : vector<1x128xf32> to vector<128x128xf32>
    %8 = arith.addf %5, %7 : vector<128x128xf32>
    %c0_6 = arith.constant 0 : index
    %c0_7 = arith.constant 0 : index
    %9 = vector.load %arg15[%c0_6, %c0_7] : memref<128x1xf32, #tpu.memory_space<vmem>>, vector<128x1xf32>
    %10 = math.absf %8 : vector<128x128xf32>
    %cst_8 = arith.constant dense<0.000000e+00> : vector<128xf32>
    %11 = vector.multi_reduction <add>, %10, %cst_8 [1] : vector<128x128xf32> to vector<128xf32>
    %12 = vector.shape_cast %11 : vector<128xf32> to vector<128x1xf32>
    %13 = arith.addf %9, %12 : vector<128x1xf32>
    %c0_9 = arith.constant 0 : index
    %c0_10 = arith.constant 0 : index
    %14 = vector.load %arg15[%c0_9, %c0_10] : memref<128x1xf32, #tpu.memory_space<vmem>>, vector<128x1xf32>
    tpu.vector_store %arg15[%c0_9, %c0_10], %13 {strides = array<i32>} : memref<128x1xf32, #tpu.memory_space<vmem>>, vector<128x1xf32>,
    %c0_11 = arith.constant 0 : index
    %c0_12 = arith.constant 0 : index
    %15 = vector.load %arg14[%c0_11, %c0_12] : memref<128x128xf32, #tpu.memory_space<vmem>>, vector<128x128xf32>
    %c0_13 = arith.constant 0 : index
    %c0_14 = arith.constant 0 : index
    %16 = vector.load %arg7[%c0_13, %c0_14] : memref<128x128xf32, #tpu.memory_space<vmem>>, vector<128x128xf32>
    %cst_15 = arith.constant dense<0.000000e+00> : vector<128x128xf32>
    %17 = tpu.matmul %8, %16, %cst_15 {dimension_numbers = #tpu.dot_dimension_numbers<[1], [0], [0], [1], [0, 0, 1, 1], [], []>} : vector<128x128xf32>, vector<128x128xf32>, vector<128x128xf32> -> vector<128x128xf32>
    %18 = arith.addf %15, %17 : vector<128x128xf32>
    %c0_16 = arith.constant 0 : index
    %c0_17 = arith.constant 0 : index
    %19 = vector.load %arg14[%c0_16, %c0_17] : memref<128x128xf32, #tpu.memory_space<vmem>>, vector<128x128xf32>
    tpu.vector_store %arg14[%c0_16, %c0_17], %18 {strides = array<i32>} : memref<128x128xf32, #tpu.memory_space<vmem>>, vector<128x128xf32>,
    %c1_i32 = arith.constant 1 : i32
    %20 = arith.cmpi eq, %arg1, %c1_i32 : i32
    %21 = arith.extui %20 : i1 to i32
    %c0_i32_18 = arith.constant 0 : i32
    %22 = arith.cmpi ne, %21, %c0_i32_18 : i32
    scf.if %22 {
      %c0_19 = arith.constant 0 : index
      %c0_20 = arith.constant 0 : index
      %23 = vector.load %arg14[%c0_19, %c0_20] : memref<128x128xf32, #tpu.memory_space<vmem>>, vector<128x128xf32>
      %c0_21 = arith.constant 0 : index
      %c0_22 = arith.constant 0 : index
      %24 = vector.load %arg8[%c0_21, %c0_22] : memref<1x128xf32, #tpu.memory_space<vmem>>, vector<1x128xf32>
      %25 = vector.broadcast %24 : vector<1x128xf32> to vector<128x128xf32>
      %26 = arith.addf %23, %25 : vector<128x128xf32>
      %cst_23 = arith.constant 0.000000e+00 : f32
      %27 = vector.broadcast %cst_23 : f32 to vector<128x128xf32>
      %28 = arith.maximumf %26, %27 : vector<128x128xf32>
      %c0_24 = arith.constant 0 : index
      %c0_25 = arith.constant 0 : index
      %29 = vector.load %arg9[%c0_24, %c0_25] : memref<128x128xf32, #tpu.memory_space<vmem>>, vector<128x128xf32>
      %cst_26 = arith.constant dense<0.000000e+00> : vector<128x128xf32>
      %30 = tpu.matmul %28, %29, %cst_26 {dimension_numbers = #tpu.dot_dimension_numbers<[1], [0], [0], [1], [0, 0, 1, 1], [], []>} : vector<128x128xf32>, vector<128x128xf32>, vector<128x128xf32> -> vector<128x128xf32>
      %c0_27 = arith.constant 0 : index
      %c0_28 = arith.constant 0 : index
      %31 = vector.load %arg10[%c0_27, %c0_28] : memref<1x128xf32, #tpu.memory_space<vmem>>, vector<1x128xf32>
      %32 = vector.broadcast %31 : vector<1x128xf32> to vector<128x128xf32>
      %33 = arith.addf %30, %32 : vector<128x128xf32>
      %c0_29 = arith.constant 0 : index
      %c0_30 = arith.constant 0 : index
      %34 = vector.load %arg11[%c0_29, %c0_30] : memref<128x128xf32, #tpu.memory_space<vmem>>, vector<128x128xf32>
      tpu.vector_store %arg11[%c0_29, %c0_30], %33 {strides = array<i32>} : memref<128x128xf32, #tpu.memory_space<vmem>>, vector<128x128xf32>,
      %c0_31 = arith.constant 0 : index
      %c0_32 = arith.constant 0 : index
      %35 = vector.load %arg15[%c0_31, %c0_32] : memref<128x1xf32, #tpu.memory_space<vmem>>, vector<128x1xf32>
      %c0_33 = arith.constant 0 : index
      %c0_34 = arith.constant 0 : index
      %36 = vector.load %arg12[%c0_33, %c0_34] : memref<128x1xf32, #tpu.memory_space<vmem>>, vector<128x1xf32>
      tpu.vector_store %arg12[%c0_33, %c0_34], %35 {strides = array<i32>} : memref<128x1xf32, #tpu.memory_space<vmem>>, vector<128x1xf32>,
    } else {
    }
    return
  }
  func.func @transform_0(%arg0: i32, %arg1: i32) -> (i32, i32) {
    %c0_i32 = arith.constant 0 : i32
    %c0_i32_0 = arith.constant 0 : i32
    return %arg0, %c0_i32 : i32, i32
  }
  func.func @transform_1(%arg0: i32, %arg1: i32) -> (i32, i32) {
    %c0_i32 = arith.constant 0 : i32
    %c0_i32_0 = arith.constant 0 : i32
    %c0_i32_1 = arith.constant 0 : i32
    return %c0_i32, %c0_i32_0 : i32, i32
  }
  func.func @transform_2(%arg0: i32, %arg1: i32) -> (i32, i32) {
    %c0_i32 = arith.constant 0 : i32
    %c0_i32_0 = arith.constant 0 : i32
    %c0_i32_1 = arith.constant 0 : i32
    return %c0_i32, %c0_i32_0 : i32, i32
  }
  func.func @transform_3(%arg0: i32, %arg1: i32) -> (i32, i32) {
    %c0_i32 = arith.constant 0 : i32
    %c0_i32_0 = arith.constant 0 : i32
    return %c0_i32, %arg1 : i32, i32
  }
  func.func @transform_4(%arg0: i32, %arg1: i32) -> (i32, i32) {
    %c0_i32 = arith.constant 0 : i32
    %c0_i32_0 = arith.constant 0 : i32
    return %c0_i32, %arg1 : i32, i32
  }
  func.func @transform_5(%arg0: i32, %arg1: i32) -> (i32, i32) {
    %c0_i32 = arith.constant 0 : i32
    %c0_i32_0 = arith.constant 0 : i32
    return %arg1, %c0_i32 : i32, i32
  }
  func.func @transform_6(%arg0: i32, %arg1: i32) -> (i32, i32) {
    %c0_i32 = arith.constant 0 : i32
    %c0_i32_0 = arith.constant 0 : i32
    %c0_i32_1 = arith.constant 0 : i32
    return %c0_i32, %c0_i32_0 : i32, i32
  }
  func.func @transform_7(%arg0: i32, %arg1: i32) -> (i32, i32) {
    %c0_i32 = arith.constant 0 : i32
    %c0_i32_0 = arith.constant 0 : i32
    %c0_i32_1 = arith.constant 0 : i32
    return %c0_i32, %c0_i32_0 : i32, i32
  }
  func.func @transform_8(%arg0: i32, %arg1: i32) -> (i32, i32) {
    %c0_i32 = arith.constant 0 : i32
    %c0_i32_0 = arith.constant 0 : i32
    %c0_i32_1 = arith.constant 0 : i32
    return %c0_i32, %c0_i32_0 : i32, i32
  }
  func.func @transform_9(%arg0: i32, %arg1: i32) -> (i32, i32) {
    %c0_i32 = arith.constant 0 : i32
    %c0_i32_0 = arith.constant 0 : i32
    return %arg0, %c0_i32 : i32, i32
  }
  func.func @transform_10(%arg0: i32, %arg1: i32) -> (i32, i32) {
    %c0_i32 = arith.constant 0 : i32
    %c0_i32_0 = arith.constant 0 : i32
    return %arg0, %c0_i32 : i32, i32
  }
}

</mosaic_0001>

<llo_original>
// kernel: tpu_custom_call.1
$region0: #{tpu_custom_call.1}
  #allocation0 [shape = 'u32[]', space=smem, size = 0x4, offset = 0x4, fixed_abs, tag = 'smem constant byte address 0x4 - core index']
  #allocation1 [shape = 'u32[144,128]{1,0:T(1,128)}', space=vmem, size = 0x12000, scoped, tag = 'internal scratch']
  #allocation2 [shape = 'f32[128,128]{1,0:T(8,128)}', space=vmem, size = 0x10000, scoped, tag = 'scratch operand']
  #allocation3 [shape = 'f32[128,128]{1,0:T(8,128)}', space=vmem, size = 0x10000, scoped, tag = 'scratch operand']
  #allocation4 [shape = 'f32[128,1]{1,0:T(8,128)}', space=vmem, size = 0x10000, scoped, tag = 'scratch operand']
  %s0 = inlined_call_operand.vmem [shape: f32[256,32], index: 0, kind: input, shape index: {}]
  %s1 = inlined_call_operand.vmem [shape: f32[32,128], index: 1, kind: input, shape index: {}]
  %s2 = inlined_call_operand.vmem [shape: f32[1,128], index: 2, kind: input, shape index: {}]
  %s3 = inlined_call_operand.vmem [shape: f32[128,256], index: 3, kind: input, shape index: {}]
  %s4 = inlined_call_operand.vmem [shape: f32[1,256], index: 4, kind: input, shape index: {}]
  %s5 = inlined_call_operand.hbm [shape: f32[256,128], index: 5, kind: input, shape index: {}]
  %s6 = inlined_call_operand.vmem [shape: f32[1,128], index: 6, kind: input, shape index: {}]
  %s7 = inlined_call_operand.hbm [shape: f32[128,128], index: 7, kind: input, shape index: {}]
  %s8 = inlined_call_operand.vmem [shape: f32[1,128], index: 8, kind: input, shape index: {}]
  %s9 = inlined_call_operand.hbm [shape: f32[256,128], index: 9, kind: output, shape index: {0}]
  %s10 = inlined_call_operand.vmem [shape: f32[256,1], index: 10, kind: output, shape index: {1}]
  %11 = xla_tuple %s9, %s10
  %s12 = sld [smem:[#allocation0]]
  $region131: #{tpu_custom_call.1} parent=0
    _
  %s14 = ssub.s32 1, %s12
  %s15 = scalar_select 0, %s14, %s12
  $region1: #{tpu_custom_call.1} parent=0
    #allocation5 [shape = 'u8[131072]{0}', space=vmem, size = 0x20000, scoped, tag = 'input window, operand 3']
    #allocation6 [shape = 'u8[131072]{0}', space=vmem, size = 0x20000, scoped, tag = 'input window, operand 5']
    #allocation7 [shape = 's32[2]{0}', space=sflag, size = 0x8, scoped, tag = 'scoped memory for tpu_custom_call.1']
    #allocation8 [shape = 's32[2]{0}', space=sflag, size = 0x8, scoped, tag = 'scoped memory for tpu_custom_call.1']
    #allocation9 [shape = 'u8[65536]{0}', space=vmem, size = 0x10000, scoped, tag = 'input window, operand 7, single buffered']
    #allocation10 [shape = 's32[1]{0}', space=sflag, size = 0x4, scoped, tag = 'scoped memory for tpu_custom_call.1']
    #allocation11 [shape = 'u8[131072]{0}', space=vmem, size = 0x20000, scoped, tag = 'output window, operand 0']
    %16 = vsyncpa [#allocation7], 0
    %s17 = scalar_lea.sflag [#allocation7], 1
    %18 = vsyncpa %s17, 0
    %19 = vsyncpa [#allocation10], 0
    %20 = vsyncpa [#allocation8], 0
    %s21 = scalar_lea.sflag [#allocation8], 1
    %22 = vsyncpa %s21, 0
    loop: start=0, step=1, limit=6
    $region2: #{tpu_custom_call.1} parent=1 // loop_pre_header
      _
    $region3: #{tpu_custom_call.1} parent=1 // loop_header
      %s24 = sphi 0, %s28
      %p25 = scmp.ge.s32.totalorder %s24, 6
      %s31 = sphi 0, %s43
      %s32 = sphi 0, %s39
      %s33 = sphi 0, %s31
      %s34 = sphi 0, %s32
      %s35 = sphi 0, %s33
      %s36 = sphi 0, %s34
      %s46 = sphi 0, %s48
      %s49 = sphi 0, %s46
      %s50 = sphi 0, %s49
      %s66 = sphi 0, %s50
      %s70 = sphi 0, %s70
      %s72 = sphi 0, %s70
      %s73 = sphi 0, %s72
      %s87 = sphi 0, %s73
      %s91 = sphi 0, %s91
      %s93 = sphi 0, %s91
      %s94 = sphi 0, %s93
      %s108 = sphi 0, %s94
      %s114 = sphi 0, %s116
      %s117 = sphi 0, %s114
      %s118 = sphi 0, %s117
      %s134 = sphi 0, %s118
      %s140 = sphi 0, %s142
      %s143 = sphi 0, %s140
      %s144 = sphi 0, %s143
      %s160 = sphi 0, %s144
      %s166 = sphi 0, %s168
      %s169 = sphi 0, %s166
      %s170 = sphi 0, %s169
      %s186 = sphi 0, %s170
      %s190 = sphi 0, %s190
      %s192 = sphi 0, %s190
      %s193 = sphi 0, %s192
      %s207 = sphi 0, %s193
      %s211 = sphi 0, %s211
      %s213 = sphi 0, %s211
      %s214 = sphi 0, %s213
      %s228 = sphi 0, %s214
      %s232 = sphi 0, %s232
      %s234 = sphi 0, %s232
      %s235 = sphi 0, %s234
      %s249 = sphi 0, %s235
      %s255 = sphi 0, %s257
      %s258 = sphi 0, %s255
      %s259 = sphi 0, %s258
      %s275 = sphi 0, %s259
      %s281 = sphi 0, %s283
      %s284 = sphi 0, %s281
      %s285 = sphi 0, %s284
      %s301 = sphi 0, %s285
    $region4: #{tpu_custom_call.1} parent=1 // loop_header_branch
      %27 = sbr.rel (%p25) target = $region8
    $region5: #{tpu_custom_call.1} parent=1 // loop_body
      %s29 = ssub.s32 %s24, 1
      %s30 = ssub.s32 %s24, 2
      %s37 = sadd.s32 1, %s32
      %p38 = scmp.ge.s32.totalorder %s37, 2
      %s39 = scalar_select %p38, 0, %s37
      %s40 = sadd.s32 1, %s31
      %s41 = scalar_select %p38, %s40, %s31
      %p42 = scmp.ge.s32.totalorder %s41, 2
      %s43 = scalar_select %p42, 0, %s41
      %s44 = ssub.s32 %s31, %s43
      %p45 = scmp.eq.s32.totalorder %s44, 0
      %s47 = sadd.s32 %s46, 1
      %s48 = scalar_select %p45, %s46, %s47
      %p51 = pneg %p45
      %p52 = scmp.eq.s32.totalorder %s24, 3
      %p53 = por %p51, %p52
      %p54 = scmp.ne.s32.totalorder %s46, %s49
      %p55 = scmp.eq.s32.totalorder %s24, 0
      %p56 = por %p54, %p55
      %p57 = scmp.ne.s32.totalorder %s46, %s49
      %p58 = scmp.eq.s32.totalorder %s29, 3
      %p59 = por %p57, %p58
      %p60 = scmp.ne.s32.totalorder %s49, %s50
      %p61 = scmp.eq.s32.totalorder %s29, 0
      %p62 = por %p60, %p61
      %p63 = scmp.ne.s32.totalorder %s49, %s50
      %p64 = scmp.eq.s32.totalorder %s30, 3
      %p65 = por %p63, %p64
      %p67 = scmp.ne.s32.totalorder %s50, %s66
      %p68 = scmp.eq.s32.totalorder %s30, 0
      %p69 = por %p67, %p68
      %s71 = sadd.s32 %s70, 1
      %p74 = scmp.eq.s32.totalorder %s24, 3
      %p75 = scmp.ne.s32.totalorder %s70, %s72
      %p76 = scmp.eq.s32.totalorder %s24, 0
      %p77 = por %p75, %p76
      %p78 = scmp.ne.s32.totalorder %s70, %s72
      %p79 = scmp.eq.s32.totalorder %s29, 3
      %p80 = por %p78, %p79
      %p81 = scmp.ne.s32.totalorder %s72, %s73
      %p82 = scmp.eq.s32.totalorder %s29, 0
      %p83 = por %p81, %p82
      %p84 = scmp.ne.s32.totalorder %s72, %s73
      %p85 = scmp.eq.s32.totalorder %s30, 3
      %p86 = por %p84, %p85
      %p88 = scmp.ne.s32.totalorder %s73, %s87
      %p89 = scmp.eq.s32.totalorder %s30, 0
      %p90 = por %p88, %p89
      %s92 = sadd.s32 %s91, 1
      %p95 = scmp.eq.s32.totalorder %s24, 3
      %p96 = scmp.ne.s32.totalorder %s91, %s93
      %p97 = scmp.eq.s32.totalorder %s24, 0
      %p98 = por %p96, %p97
      %p99 = scmp.ne.s32.totalorder %s91, %s93
      %p100 = scmp.eq.s32.totalorder %s29, 3
      %p101 = por %p99, %p100
      %p102 = scmp.ne.s32.totalorder %s93, %s94
      %p103 = scmp.eq.s32.totalorder %s29, 0
      %p104 = por %p102, %p103
      %p105 = scmp.ne.s32.totalorder %s93, %s94
      %p106 = scmp.eq.s32.totalorder %s30, 3
      %p107 = por %p105, %p106
      %p109 = scmp.ne.s32.totalorder %s94, %s108
      %p110 = scmp.eq.s32.totalorder %s30, 0
      %p111 = por %p109, %p110
      %s112 = ssub.s32 %s32, %s39
      %p113 = scmp.eq.s32.totalorder %s112, 0
      %s115 = sadd.s32 %s114, 1
      %s116 = scalar_select %p113, %s114, %s115
      %p119 = pneg %p113
      %p120 = scmp.eq.s32.totalorder %s24, 3
      %p121 = por %p119, %p120
      %p122 = scmp.ne.s32.totalorder %s114, %s117
      %p123 = scmp.eq.s32.totalorder %s24, 0
      %p124 = por %p122, %p123
      %p125 = scmp.ne.s32.totalorder %s114, %s117
      %p126 = scmp.eq.s32.totalorder %s29, 3
      %p127 = por %p125, %p126
      %p128 = scmp.ne.s32.totalorder %s117, %s118
      %p129 = scmp.eq.s32.totalorder %s29, 0
      %p130 = por %p128, %p129
      %p131 = scmp.ne.s32.totalorder %s117, %s118
      %p132 = scmp.eq.s32.totalorder %s30, 3
      %p133 = por %p131, %p132
      %p135 = scmp.ne.s32.totalorder %s118, %s134
      %p136 = scmp.eq.s32.totalorder %s30, 0
      %p137 = por %p135, %p136
      %s138 = ssub.s32 %s32, %s39
      %p139 = scmp.eq.s32.totalorder %s138, 0
      %s141 = sadd.s32 %s140, 1
      %s142 = scalar_select %p139, %s140, %s141
      %p145 = pneg %p139
      %p146 = scmp.eq.s32.totalorder %s24, 3
      %p147 = por %p145, %p146
      %p148 = scmp.ne.s32.totalorder %s140, %s143
      %p149 = scmp.eq.s32.totalorder %s24, 0
      %p150 = por %p148, %p149
      %p151 = scmp.ne.s32.totalorder %s140, %s143
      %p152 = scmp.eq.s32.totalorder %s29, 3
      %p153 = por %p151, %p152
      %p154 = scmp.ne.s32.totalorder %s143, %s144
      %p155 = scmp.eq.s32.totalorder %s29, 0
      %p156 = por %p154, %p155
      %p157 = scmp.ne.s32.totalorder %s143, %s144
      %p158 = scmp.eq.s32.totalorder %s30, 3
      %p159 = por %p157, %p158
      %p161 = scmp.ne.s32.totalorder %s144, %s160
      %p162 = scmp.eq.s32.totalorder %s30, 0
      %p163 = por %p161, %p162
      %s164 = ssub.s32 %s32, %s39
      %p165 = scmp.eq.s32.totalorder %s164, 0
      %s167 = sadd.s32 %s166, 1
      %s168 = scalar_select %p165, %s166, %s167
      %p171 = pneg %p165
      %p172 = scmp.eq.s32.totalorder %s24, 3
      %p173 = por %p171, %p172
      %p174 = scmp.ne.s32.totalorder %s166, %s169
      %p175 = scmp.eq.s32.totalorder %s24, 0
      %p176 = por %p174, %p175
      %p177 = scmp.ne.s32.totalorder %s166, %s169
      %p178 = scmp.eq.s32.totalorder %s29, 3
      %p179 = por %p177, %p178
      %p180 = scmp.ne.s32.totalorder %s169, %s170
      %p181 = scmp.eq.s32.totalorder %s29, 0
      %p182 = por %p180, %p181
      %p183 = scmp.ne.s32.totalorder %s169, %s170
      %p184 = scmp.eq.s32.totalorder %s30, 3
      %p185 = por %p183, %p184
      %p187 = scmp.ne.s32.totalorder %s170, %s186
      %p188 = scmp.eq.s32.totalorder %s30, 0
      %p189 = por %p187, %p188
      %s191 = sadd.s32 %s190, 1
      %p194 = scmp.eq.s32.totalorder %s24, 3
      %p195 = scmp.ne.s32.totalorder %s190, %s192
      %p196 = scmp.eq.s32.totalorder %s24, 0
      %p197 = por %p195, %p196
      %p198 = scmp.ne.s32.totalorder %s190, %s192
      %p199 = scmp.eq.s32.totalorder %s29, 3
      %p200 = por %p198, %p199
      %p201 = scmp.ne.s32.totalorder %s192, %s193
      %p202 = scmp.eq.s32.totalorder %s29, 0
      %p203 = por %p201, %p202
      %p204 = scmp.ne.s32.totalorder %s192, %s193
      %p205 = scmp.eq.s32.totalorder %s30, 3
      %p206 = por %p204, %p205
      %p208 = scmp.ne.s32.totalorder %s193, %s207
      %p209 = scmp.eq.s32.totalorder %s30, 0
      %p210 = por %p208, %p209
      %s212 = sadd.s32 %s211, 1
      %p215 = scmp.eq.s32.totalorder %s24, 3
      %p216 = scmp.ne.s32.totalorder %s211, %s213
      %p217 = scmp.eq.s32.totalorder %s24, 0
      %p218 = por %p216, %p217
      %p219 = scmp.ne.s32.totalorder %s211, %s213
      %p220 = scmp.eq.s32.totalorder %s29, 3
      %p221 = por %p219, %p220
      %p222 = scmp.ne.s32.totalorder %s213, %s214
      %p223 = scmp.eq.s32.totalorder %s29, 0
      %p224 = por %p222, %p223
      %p225 = scmp.ne.s32.totalorder %s213, %s214
      %p226 = scmp.eq.s32.totalorder %s30, 3
      %p227 = por %p225, %p226
      %p229 = scmp.ne.s32.totalorder %s214, %s228
      %p230 = scmp.eq.s32.totalorder %s30, 0
      %p231 = por %p229, %p230
      %s233 = sadd.s32 %s232, 1
      %p236 = scmp.eq.s32.totalorder %s24, 3
      %p237 = scmp.ne.s32.totalorder %s232, %s234
      %p238 = scmp.eq.s32.totalorder %s24, 0
      %p239 = por %p237, %p238
      %p240 = scmp.ne.s32.totalorder %s232, %s234
      %p241 = scmp.eq.s32.totalorder %s29, 3
      %p242 = por %p240, %p241
      %p243 = scmp.ne.s32.totalorder %s234, %s235
      %p244 = scmp.eq.s32.totalorder %s29, 0
      %p245 = por %p243, %p244
      %p246 = scmp.ne.s32.totalorder %s234, %s235
      %p247 = scmp.eq.s32.totalorder %s30, 3
      %p248 = por %p246, %p247
      %p250 = scmp.ne.s32.totalorder %s235, %s249
      %p251 = scmp.eq.s32.totalorder %s30, 0
      %p252 = por %p250, %p251
      %s253 = ssub.s32 %s31, %s43
      %p254 = scmp.eq.s32.totalorder %s253, 0
      %s256 = sadd.s32 %s255, 1
      %s257 = scalar_select %p254, %s255, %s256
      %p260 = pneg %p254
      %p261 = scmp.eq.s32.totalorder %s24, 3
      %p262 = por %p260, %p261
      %p263 = scmp.ne.s32.totalorder %s255, %s258
      %p264 = scmp.eq.s32.totalorder %s24, 0
      %p265 = por %p263, %p264
      %p266 = scmp.ne.s32.totalorder %s255, %s258
      %p267 = scmp.eq.s32.totalorder %s29, 3
      %p268 = por %p266, %p267
      %p269 = scmp.ne.s32.totalorder %s258, %s259
      %p270 = scmp.eq.s32.totalorder %s29, 0
      %p271 = por %p269, %p270
      %p272 = scmp.ne.s32.totalorder %s258, %s259
      %p273 = scmp.eq.s32.totalorder %s30, 3
      %p274 = por %p272, %p273
      %p276 = scmp.ne.s32.totalorder %s259, %s275
      %p277 = scmp.eq.s32.totalorder %s30, 0
      %p278 = por %p276, %p277
      %s279 = ssub.s32 %s31, %s43
      %p280 = scmp.eq.s32.totalorder %s279, 0
      %s282 = sadd.s32 %s281, 1
      %s283 = scalar_select %p280, %s281, %s282
      %p286 = pneg %p280
      %p287 = scmp.eq.s32.totalorder %s24, 3
      %p288 = por %p286, %p287
      %p289 = scmp.ne.s32.totalorder %s281, %s284
      %p290 = scmp.eq.s32.totalorder %s24, 0
      %p291 = por %p289, %p290
      %p292 = scmp.ne.s32.totalorder %s281, %s284
      %p293 = scmp.eq.s32.totalorder %s29, 3
      %p294 = por %p292, %p293
      %p295 = scmp.ne.s32.totalorder %s284, %s285
      %p296 = scmp.eq.s32.totalorder %s29, 0
      %p297 = por %p295, %p296
      %p298 = scmp.ne.s32.totalorder %s284, %s285
      %p299 = scmp.eq.s32.totalorder %s30, 3
      %p300 = por %p298, %p299
      %p302 = scmp.ne.s32.totalorder %s285, %s301
      %p303 = scmp.eq.s32.totalorder %s30, 0
      %p304 = por %p302, %p303
      %p305 = scmp.le.s32.totalorder 1, %s24
      %p306 = scmp.lt.s32.totalorder %s24, 5
      %p307 = pnand %p305, %p306
      %p308 = pneg %p307
      // Predicated region
      $region9: #{tpu_custom_call.1} parent=5 // pred_check
        _
      $region10: #{tpu_custom_call.1} parent=5 // pred_check_branch
        %310 = sbr.rel (%p307) target = $region12
      $region11: #{tpu_custom_call.1} parent=5 // pred_region
        %s311 = ssub.s32 %s24, 1
        // Predicated region
        $region13: #{tpu_custom_call.1} parent=11 // pred_check
          %p312 = pneg %p83
        $region14: #{tpu_custom_call.1} parent=11 // pred_check_branch
          %314 = sbr.rel (%p312) target = $region16
        $region15: #{tpu_custom_call.1} parent=11 // pred_region
          _
        $region16: #{tpu_custom_call.1} parent=11 // pred_fallthru
          _
        // Predicated region
        $region17: #{tpu_custom_call.1} parent=11 // pred_check
          %p315 = pneg %p104
        $region18: #{tpu_custom_call.1} parent=11 // pred_check_branch
          %317 = sbr.rel (%p315) target = $region20
        $region19: #{tpu_custom_call.1} parent=11 // pred_region
          _
        $region20: #{tpu_custom_call.1} parent=11 // pred_fallthru
          _
        // Predicated region
        $region21: #{tpu_custom_call.1} parent=11 // pred_check
          %p318 = pneg %p203
        $region22: #{tpu_custom_call.1} parent=11 // pred_check_branch
          %320 = sbr.rel (%p318) target = $region24
        $region23: #{tpu_custom_call.1} parent=11 // pred_region
          _
        $region24: #{tpu_custom_call.1} parent=11 // pred_fallthru
          _
        // Predicated region
        $region25: #{tpu_custom_call.1} parent=11 // pred_check
          %p321 = pneg %p224
        $region26: #{tpu_custom_call.1} parent=11 // pred_check_branch
          %323 = sbr.rel (%p321) target = $region28
        $region27: #{tpu_custom_call.1} parent=11 // pred_region
          %s325 = ssub.s32 2048, 2048
          %326 = vsyncadd [#allocation10], %s325
          %s327 = sshll.u32 [#allocation9], 4
          %s328 = int_to_ptr.vmem [resolvable:$true] %s327
          %333 = dma.hbm_to_vmem [thread:$0]  %s7, 2048, %s328, [#allocation10], 128, 128, 8
        $region28: #{tpu_custom_call.1} parent=11 // pred_fallthru
          _
        // Predicated region
        $region29: #{tpu_custom_call.1} parent=11 // pred_check
          %p334 = pneg %p245
        $region30: #{tpu_custom_call.1} parent=11 // pred_check_branch
          %336 = sbr.rel (%p334) target = $region32
        $region31: #{tpu_custom_call.1} parent=11 // pred_region
          _
        $region32: #{tpu_custom_call.1} parent=11 // pred_fallthru
          _
      $region12: #{tpu_custom_call.1} parent=5 // pred_fallthru
        _
      %p337 = scmp.lt.s32.totalorder %s24, 4
      // Predicated region
      $region33: #{tpu_custom_call.1} parent=5 // pred_check
        %p338 = pneg %p337
      $region34: #{tpu_custom_call.1} parent=5 // pred_check_branch
        %340 = sbr.rel (%p338) target = $region36
      $region35: #{tpu_custom_call.1} parent=5 // pred_region
        // Predicated region
        $region37: #{tpu_custom_call.1} parent=35 // pred_check
          %p341 = pneg %p56
        $region38: #{tpu_custom_call.1} parent=35 // pred_check_branch
          %343 = sbr.rel (%p341) target = $region40
        $region39: #{tpu_custom_call.1} parent=35 // pred_region
          %s344 = smul.u32 16, %s31
          %p345 = scmp.lt.s32.totalorder %s344, 31
          %s346 = scalar_select %p345, %s344, 31
          %s347 = smul.addr %s346, 8
          %s348 = scalar_lea.vmem %s0, %s347
          %s349 = smul.u32 16, %s31
        $region40: #{tpu_custom_call.1} parent=35 // pred_fallthru
          _
        // Predicated region
        $region41: #{tpu_custom_call.1} parent=35 // pred_check
          %p350 = pneg %p124
        $region42: #{tpu_custom_call.1} parent=35 // pred_check_branch
          %352 = sbr.rel (%p350) target = $region44
        $region43: #{tpu_custom_call.1} parent=35 // pred_region
          %s353 = sand.u32 %s114, 1
          %s354 = sand.u32 %s114, 1
          %s355 = smul.addr %s354, 128
          %s356 = scalar_lea.vmem [#allocation5], %s355
          %s357 = smul.addr %s32, 8
          %s358 = scalar_lea.vmem %s3, %s357
          // Predicated region
          $region45: #{tpu_custom_call.1} parent=43 // pred_check
            _
          $region46: #{tpu_custom_call.1} parent=43 // pred_check_branch
            %360 = sbr.rel (0) target = $region48
          $region47: #{tpu_custom_call.1} parent=43 // pred_region
            // Predicated region
            $region49: #{tpu_custom_call.1} parent=47 // pred_check
              _
            $region50: #{tpu_custom_call.1} parent=47 // pred_check_branch
              %362 = sbr.rel (0) target = $region52
            $region51: #{tpu_custom_call.1} parent=47 // pred_region
              // Predicated region
              $region64: #{tpu_custom_call.1} parent=51 // pred_check
                _
              $region65: #{tpu_custom_call.1} parent=51 // pred_check_branch
                %408 = sbr.rel (0) target = $region67
              $region66: #{tpu_custom_call.1} parent=51 // pred_region
                loop: start=0, step=1, limit=1
                $region68: #{tpu_custom_call.1} parent=66 // loop_pre_header
                  _
                $region69: #{tpu_custom_call.1} parent=66 // loop_header
                  %s410 = sphi 0, %s414
                  %p411 = scmp.ge.s32.totalorder %s410, 1
                  %s415 = sphi %s358, %s358
                  %s416 = sphi %s356, %s356
                $region70: #{tpu_custom_call.1} parent=66 // loop_header_branch
                  %413 = sbr.rel (%p411) target = $region74
                $region71: #{tpu_custom_call.1} parent=66 // loop_body
                  %v417 = vld [vmem:[%s415] sm:$0xff]
                  %418 = vst [vmem:[%s416] sm:$0xff] %v417
                  %v419 = vld [vmem:[%s415 + $0x10] sm:$0xff]
                  %420 = vst [vmem:[%s416 + $0x8] sm:$0xff] %v419
                  %v421 = vld [vmem:[%s415 + $0x20] sm:$0xff]
                  %422 = vst [vmem:[%s416 + $0x10] sm:$0xff] %v421
                  %v423 = vld [vmem:[%s415 + $0x30] sm:$0xff]
                  %424 = vst [vmem:[%s416 + $0x18] sm:$0xff] %v423
                  %v425 = vld [vmem:[%s415 + $0x40] sm:$0xff]
                  %426 = vst [vmem:[%s416 + $0x20] sm:$0xff] %v425
                  %v427 = vld [vmem:[%s415 + $0x50] sm:$0xff]
                  %428 = vst [vmem:[%s416 + $0x28] sm:$0xff] %v427
                  %v429 = vld [vmem:[%s415 + $0x60] sm:$0xff]
                  %430 = vst [vmem:[%s416 + $0x30] sm:$0xff] %v429
                  %v431 = vld [vmem:[%s415 + $0x70] sm:$0xff]
                  %432 = vst [vmem:[%s416 + $0x38] sm:$0xff] %v431
                  %v433 = vld [vmem:[%s415 + $0x80] sm:$0xff]
                  %434 = vst [vmem:[%s416 + $0x40] sm:$0xff] %v433
                  %v435 = vld [vmem:[%s415 + $0x90] sm:$0xff]
                  %436 = vst [vmem:[%s416 + $0x48] sm:$0xff] %v435
                  %v437 = vld [vmem:[%s415 + $0xa0] sm:$0xff]
                  %438 = vst [vmem:[%s416 + $0x50] sm:$0xff] %v437
                  %v439 = vld [vmem:[%s415 + $0xb0] sm:$0xff]
                  %440 = vst [vmem:[%s416 + $0x58] sm:$0xff] %v439
                  %v441 = vld [vmem:[%s415 + $0xc0] sm:$0xff]
                  %442 = vst [vmem:[%s416 + $0x60] sm:$0xff] %v441
                  %v443 = vld [vmem:[%s415 + $0xd0] sm:$0xff]
                  %444 = vst [vmem:[%s416 + $0x68] sm:$0xff] %v443
                  %v445 = vld [vmem:[%s415 + $0xe0] sm:$0xff]
                  %446 = vst [vmem:[%s416 + $0x70] sm:$0xff] %v445
                  %v447 = vld [vmem:[%s415 + $0xf0] sm:$0xff]
                  %448 = vst [vmem:[%s416 + $0x78] sm:$0xff] %v447
                $region72: #{tpu_custom_call.1} parent=66 // loop_footer
                  %s414 = sadd.s32 1, %s410
                $region73: #{tpu_custom_call.1} parent=66 // loop_footer_branch
                  %409 = sbr.rel target = $region69
                $region74: #{tpu_custom_call.1} parent=66 // loop_exit
                  _
              $region67: #{tpu_custom_call.1} parent=51 // pred_fallthru
                _
              // Predicated region
              $region75: #{tpu_custom_call.1} parent=51 // pred_check
                _
              $region76: #{tpu_custom_call.1} parent=51 // pred_check_branch
                %450 = sbr.rel target = $region78
              $region77: #{tpu_custom_call.1} parent=51 // pred_region
                _
              $region78: #{tpu_custom_call.1} parent=51 // pred_fallthru
                _
            $region52: #{tpu_custom_call.1} parent=47 // pred_fallthru
              _
            // Predicated region
            $region53: #{tpu_custom_call.1} parent=47 // pred_check
              _
            $region54: #{tpu_custom_call.1} parent=47 // pred_check_branch
              %364 = sbr.rel target = $region56
            $region55: #{tpu_custom_call.1} parent=47 // pred_region
              %s366 = ssub.s32 256, 1
              loop: start=0, step=1, limit=1
              $region57: #{tpu_custom_call.1} parent=55 // loop_pre_header
                _
              $region58: #{tpu_custom_call.1} parent=55 // loop_header
                %s368 = sphi 0, %s372
                %p369 = scmp.ge.s32.totalorder %s368, 1
                %s373 = sphi %s358, %s358
                %s374 = sphi %s356, %s356
              $region59: #{tpu_custom_call.1} parent=55 // loop_header_branch
                %371 = sbr.rel (%p369) target = $region63
              $region60: #{tpu_custom_call.1} parent=55 // loop_body
                %v375 = vld [vmem:[%s373] sm:%s366]
                %376 = vst [vmem:[%s374] sm:%s366] %v375
                %v377 = vld [vmem:[%s373 + $0x10] sm:%s366]
                %378 = vst [vmem:[%s374 + $0x8] sm:%s366] %v377
                %v379 = vld [vmem:[%s373 + $0x20] sm:%s366]
                %380 = vst [vmem:[%s374 + $0x10] sm:%s366] %v379
                %v381 = vld [vmem:[%s373 + $0x30] sm:%s366]
                %382 = vst [vmem:[%s374 + $0x18] sm:%s366] %v381
                %v383 = vld [vmem:[%s373 + $0x40] sm:%s366]
                %384 = vst [vmem:[%s374 + $0x20] sm:%s366] %v383
                %v385 = vld [vmem:[%s373 + $0x50] sm:%s366]
                %386 = vst [vmem:[%s374 + $0x28] sm:%s366] %v385
                %v387 = vld [vmem:[%s373 + $0x60] sm:%s366]
                %388 = vst [vmem:[%s374 + $0x30] sm:%s366] %v387
                %v389 = vld [vmem:[%s373 + $0x70] sm:%s366]
                %390 = vst [vmem:[%s374 + $0x38] sm:%s366] %v389
                %v391 = vld [vmem:[%s373 + $0x80] sm:%s366]
                %392 = vst [vmem:[%s374 + $0x40] sm:%s366] %v391
                %v393 = vld [vmem:[%s373 + $0x90] sm:%s366]
                %394 = vst [vmem:[%s374 + $0x48] sm:%s366] %v393
                %v395 = vld [vmem:[%s373 + $0xa0] sm:%s366]
                %396 = vst [vmem:[%s374 + $0x50] sm:%s366] %v395
                %v397 = vld [vmem:[%s373 + $0xb0] sm:%s366]
                %398 = vst [vmem:[%s374 + $0x58] sm:%s366] %v397
                %v399 = vld [vmem:[%s373 + $0xc0] sm:%s366]
                %400 = vst [vmem:[%s374 + $0x60] sm:%s366] %v399
                %v401 = vld [vmem:[%s373 + $0xd0] sm:%s366]
                %402 = vst [vmem:[%s374 + $0x68] sm:%s366] %v401
                %v403 = vld [vmem:[%s373 + $0xe0] sm:%s366]
                %404 = vst [vmem:[%s374 + $0x70] sm:%s366] %v403
                %v405 = vld [vmem:[%s373 + $0xf0] sm:%s366]
                %406 = vst [vmem:[%s374 + $0x78] sm:%s366] %v405
              $region61: #{tpu_custom_call.1} parent=55 // loop_footer
                %s372 = sadd.s32 1, %s368
              $region62: #{tpu_custom_call.1} parent=55 // loop_footer_branch
                %367 = sbr.rel target = $region58
              $region63: #{tpu_custom_call.1} parent=55 // loop_exit
                _
            $region56: #{tpu_custom_call.1} parent=47 // pred_fallthru
              _
          $region48: #{tpu_custom_call.1} parent=43 // pred_fallthru
            _
          %451 = vnop
        $region44: #{tpu_custom_call.1} parent=35 // pred_fallthru
          _
        // Predicated region
        $region79: #{tpu_custom_call.1} parent=35 // pred_check
          %p452 = pneg %p150
        $region80: #{tpu_custom_call.1} parent=35 // pred_check_branch
          %454 = sbr.rel (%p452) target = $region82
        $region81: #{tpu_custom_call.1} parent=35 // pred_region
          %p455 = scmp.lt.s32.totalorder %s32, 1
          %s456 = scalar_select %p455, %s32, 1
          %s457 = scalar_lea.vmem %s4, %s456
        $region82: #{tpu_custom_call.1} parent=35 // pred_fallthru
          _
        // Predicated region
        $region83: #{tpu_custom_call.1} parent=35 // pred_check
          %p458 = pneg %p176
        $region84: #{tpu_custom_call.1} parent=35 // pred_check_branch
          %460 = sbr.rel (%p458) target = $region86
        $region85: #{tpu_custom_call.1} parent=35 // pred_region
          %s461 = sand.u32 %s166, 1
          %s462 = scalar_lea.sflag [#allocation7], %s461
          %s463 = sand.u32 %s166, 1
          %s464 = smul.addr %s463, 128
          %s465 = scalar_lea.vmem [#allocation6], %s464
          %s466 = smul.u32 16, %s32
          %s468 = ssub.s32 2048, 2048
          %469 = vsyncadd %s462, %s468
          %s470 = smul.addr %s466, 128
          %s471 = scalar_lea.hbm %s5, %s470
          %s472 = sshll.u32 %s465, 4
          %s473 = int_to_ptr.vmem [resolvable:$true] %s472
          %478 = dma.hbm_to_vmem [thread:$0]  %s471, 2048, %s473, %s462, 128, 128, 8
        $region86: #{tpu_custom_call.1} parent=35 // pred_fallthru
          _
      $region36: #{tpu_custom_call.1} parent=5 // pred_fallthru
        _
      %p479 = scmp.le.s32.totalorder 1, %s24
      %p480 = scmp.lt.s32.totalorder %s24, 5
      %p481 = pnand %p479, %p480
      %p482 = pneg %p481
      // Predicated region
      $region87: #{tpu_custom_call.1} parent=5 // pred_check
        _
      $region88: #{tpu_custom_call.1} parent=5 // pred_check_branch
        %484 = sbr.rel (%p481) target = $region90
      $region89: #{tpu_custom_call.1} parent=5 // pred_region
        %s485 = ssub.s32 %s24, 1
        %s486 = sand.u32 %s117, 1
        %s487 = sand.u32 %s117, 1
        %s488 = smul.addr %s487, 128
        %s489 = scalar_lea.vmem [#allocation5], %s488
        // Predicated region
        $region91: #{tpu_custom_call.1} parent=89 // pred_check
          %p490 = pneg %p130
        $region92: #{tpu_custom_call.1} parent=89 // pred_check_branch
          %492 = sbr.rel (%p490) target = $region94
        $region93: #{tpu_custom_call.1} parent=89 // pred_region
          _
        $region94: #{tpu_custom_call.1} parent=89 // pred_fallthru
          _
        %s493 = sand.u32 %s169, 1
        %s494 = scalar_lea.sflag [#allocation7], %s493
        %s495 = sand.u32 %s169, 1
        %s496 = smul.addr %s495, 128
        %s497 = scalar_lea.vmem [#allocation6], %s496
        // Predicated region
        $region95: #{tpu_custom_call.1} parent=89 // pred_check
          %p498 = pneg %p182
        $region96: #{tpu_custom_call.1} parent=89 // pred_check_branch
          %500 = sbr.rel (%p498) target = $region98
        $region97: #{tpu_custom_call.1} parent=89 // pred_region
          %501 = dma.done %s494, 2048
        $region98: #{tpu_custom_call.1} parent=89 // pred_fallthru
          _
        // Predicated region
        $region99: #{tpu_custom_call.1} parent=89 // pred_check
          %p502 = pneg %p224
        $region100: #{tpu_custom_call.1} parent=89 // pred_check_branch
          %504 = sbr.rel (%p502) target = $region102
        $region101: #{tpu_custom_call.1} parent=89 // pred_region
          %505 = dma.done [#allocation10], 2048
        $region102: #{tpu_custom_call.1} parent=89 // pred_fallthru
          _
        %s506 = smul.u32 16, %s33
        %p507 = scmp.lt.s32.totalorder %s506, 31
        %s508 = scalar_select %p507, %s506, 31
        %s509 = smul.addr %s508, 8
        %s510 = scalar_lea.vmem %s0, %s509
        %p511 = pneg %p62
        %p512 = pneg %p59
        %p513 = pneg %p83
        %p514 = pneg %p80
        %p515 = pneg %p104
        %p516 = pneg %p101
        %s517 = sand.u32 %s117, 1
        %s518 = sand.u32 %s117, 1
        %s519 = smul.addr %s518, 128
        %s520 = scalar_lea.vmem [#allocation5], %s519
        %p521 = pneg %p130
        %p522 = pneg %p127
        %p523 = scmp.lt.s32.totalorder %s34, 1
        %s524 = scalar_select %p523, %s34, 1
        %s525 = scalar_lea.vmem %s4, %s524
        %p526 = pneg %p156
        %p527 = pneg %p153
        %s528 = sand.u32 %s169, 1
        %s529 = scalar_lea.sflag [#allocation7], %s528
        %s530 = sand.u32 %s169, 1
        %s531 = smul.addr %s530, 128
        %s532 = scalar_lea.vmem [#allocation6], %s531
        %p533 = pneg %p182
        %p534 = pneg %p179
        %p535 = pneg %p203
        %p536 = pneg %p200
        %p537 = pneg %p224
        %p538 = pneg %p221
        %p539 = pneg %p245
        %p540 = pneg %p242
        %p541 = pneg %p271
        %p542 = pneg %p268
        %s543 = sand.u32 %s258, 1
        %s544 = scalar_lea.sflag [#allocation8], %s543
        %s545 = sand.u32 %s258, 1
        %s546 = smul.addr %s545, 128
        %s547 = scalar_lea.vmem [#allocation11], %s546
        %p548 = pneg %p297
        %p549 = pneg %p294
        %s550 = smul.u32 16, %s33
        %p551 = scmp.lt.s32.totalorder %s550, 31
        %s552 = scalar_select %p551, %s550, 31
        %s553 = smul.addr %s552, 8
        %s554 = scalar_lea.vmem %s10, %s553
        %s555 = smul.u32 16, %s33
        %p556 = scmp.lt.s32.totalorder %s555, 31
        %s557 = scalar_select %p556, %s555, 31
        %s558 = smul.addr %s557, 8
        %s559 = scalar_lea.vmem %s0, %s558
        %s560 = smul.u32 16, %s33
        %p561 = scmp.lt.s32.totalorder %s34, 1
        %s562 = scalar_select %p561, %s34, 1
        %s563 = scalar_lea.vmem %s4, %s562
        %s564 = smul.u32 16, %s34
        %s565 = smul.u32 16, %s33
        %s566 = smul.u32 16, %s33
        %p567 = scmp.lt.s32.totalorder %s566, 31
        %s568 = scalar_select %p567, %s566, 31
        %s569 = smul.addr %s568, 8
        %s570 = scalar_lea.vmem %s10, %s569
        %s571 = smul.u32 16, %s33
        %p572 = scmp.eq.s32.totalorder %s34, 0
        // Predicated region
        $region103: #{tpu_custom_call.1} parent=89 // pred_check
          %p573 = pneg %p572
        $region104: #{tpu_custom_call.1} parent=89 // pred_check_branch
          %575 = sbr.rel (%p573) target = $region106
        $region105: #{tpu_custom_call.1} parent=89 // pred_region
          %v576 = vld [vmem:[%s559] sm:$0xff]
          %v577 = vld [vmem:[%s559 + $0x8] sm:$0xff]
          %v578 = vld [vmem:[%s559 + $0x10] sm:$0xff]
          %v579 = vld [vmem:[%s559 + $0x18] sm:$0xff]
          %v580 = vld [vmem:[%s559 + $0x20] sm:$0xff]
          %v581 = vld [vmem:[%s559 + $0x28] sm:$0xff]
          %v582 = vld [vmem:[%s559 + $0x30] sm:$0xff]
          %v583 = vld [vmem:[%s559 + $0x38] sm:$0xff]
          %v584 = vld [vmem:[%s559 + $0x40] sm:$0xff]
          %v585 = vld [vmem:[%s559 + $0x48] sm:$0xff]
          %v586 = vld [vmem:[%s559 + $0x50] sm:$0xff]
          %v587 = vld [vmem:[%s559 + $0x58] sm:$0xff]
          %v588 = vld [vmem:[%s559 + $0x60] sm:$0xff]
          %v589 = vld [vmem:[%s559 + $0x68] sm:$0xff]
          %v590 = vld [vmem:[%s559 + $0x70] sm:$0xff]
          %v591 = vld [vmem:[%s559 + $0x78] sm:$0xff]
          %v592 = vld [vmem:[%s1] sm:$0xff]
          %v593 = vld [vmem:[%s1 + $0x8] sm:$0xff]
          %v594 = vld [vmem:[%s1 + $0x10] sm:$0xff]
          %v595 = vld [vmem:[%s1 + $0x18] sm:$0xff]
          %v596 = vld [vmem:[%s2] sm:$0x1]
          %v598 = vlaneseq
          %v599 = vshrl.u32 %v598, 7
          %v600 = vsub.s32 0, %v599
          %v601 = vrot.slane %v596, %v600
          %vm603 = vcmask 261120
          %v605 = vsel %vm603, %v576, 0
          %v608 = vsel %vm603, %v577, 0
          %v611 = vsel %vm603, %v578, 0
          %v614 = vsel %vm603, %v579, 0
          %v617 = vsel %vm603, %v580, 0
          %v620 = vsel %vm603, %v581, 0
          %v623 = vsel %vm603, %v582, 0
          %v626 = vsel %vm603, %v583, 0
          %v629 = vsel %vm603, %v584, 0
          %v632 = vsel %vm603, %v585, 0
          %v635 = vsel %vm603, %v586, 0
          %v638 = vsel %vm603, %v587, 0
          %v641 = vsel %vm603, %v588, 0
          %v644 = vsel %vm603, %v589, 0
          %v647 = vsel %vm603, %v590, 0
          %v650 = vsel %vm603, %v591, 0
          %652 = vmatprep.subr.mxu0 0.0
          %653 = vmatpush1.msra.mxu0 0.0
          %654 = vmatprep.subr.mxu0 0.0
          %655 = vmatpush1.msra.mxu0 0.0
          %656 = vmatprep.subr.mxu0 0.0
          %657 = vmatpush1.msra.mxu0 0.0
          %658 = vmatprep.subr.mxu0 0.0
          %659 = vmatpush1.msra.mxu0 0.0
          %660 = vmatprep.subr.mxu0 0.0
          %661 = vmatpush1.msra.mxu0 0.0
          %662 = vmatprep.subr.mxu0 0.0
          %663 = vmatpush1.msra.mxu0 0.0
          %664 = vmatprep.subr.mxu0 0.0
          %665 = vmatpush1.msra.mxu0 0.0
          %666 = vmatprep.subr.mxu0 0.0
          %667 = vmatpush1.msra.mxu0 0.0
          %668 = vmatprep.subr.mxu0 0.0
          %669 = vmatpush1.msra.mxu0 0.0
          %670 = vmatprep.subr.mxu0 0.0
          %671 = vmatpush1.msra.mxu0 0.0
          %672 = vmatprep.subr.mxu0 0.0
          %673 = vmatpush1.msra.mxu0 0.0
          %674 = vmatprep.subr.mxu0 0.0
          %675 = vmatpush1.msra.mxu0 0.0
          %676 = vmatprep.subr.mxu0 0.0
          %677 = vmatpush1.msra.mxu0 %v595
          %678 = vmatprep.subr.mxu0 0.0
          %679 = vmatpush1.msra.mxu0 %v594
          %680 = vmatprep.subr.mxu0 0.0
          %681 = vmatpush1.msra.mxu0 %v593
          %682 = vmatprep.subr.mxu0 0.0
          %683 = vmatpush1.msra.mxu0 %v592
          %684 = vmatprep.subr.mxu0 0.0
          %685 = vmatpush2.msra.mxu0 0.0
          %686 = vmatprep.subr.mxu0 0.0
          %687 = vmatpush2.msra.mxu0 0.0
          %688 = vmatprep.subr.mxu0 0.0
          %689 = vmatpush2.msra.mxu0 0.0
          %690 = vmatprep.subr.mxu0 0.0
          %691 = vmatpush2.msra.mxu0 0.0
          %692 = vmatprep.subr.mxu0 0.0
          %693 = vmatpush2.msra.mxu0 0.0
          %694 = vmatprep.subr.mxu0 0.0
          %695 = vmatpush2.msra.mxu0 0.0
          %696 = vmatprep.subr.mxu0 0.0
          %697 = vmatpush2.msra.mxu0 0.0
          %698 = vmatprep.subr.mxu0 0.0
          %699 = vmatpush2.msra.mxu0 0.0
          %700 = vmatprep.subr.mxu0 0.0
          %701 = vmatpush2.msra.mxu0 0.0
          %702 = vmatprep.subr.mxu0 0.0
          %703 = vmatpush2.msra.mxu0 0.0
          %704 = vmatprep.subr.mxu0 0.0
          %705 = vmatpush2.msra.mxu0 0.0
          %706 = vmatprep.subr.mxu0 0.0
          %707 = vmatpush2.msra.mxu0 0.0
          %708 = vmatprep.subr.mxu0 0.0
          %709 = vmatpush2.msra.mxu0 0.0
          %710 = vmatprep.subr.mxu0 0.0
          %711 = vmatpush2.msra.mxu0 0.0
          %712 = vmatprep.subr.mxu0 0.0
          %713 = vmatpush2.msra.mxu0 0.0
          %714 = vmatprep.subr.mxu0 0.0
          %715 = vmatpush2.msra.mxu0 0.0
          %716 = vmatprep.mubr.f32.mxu0 0.0
          %717 = vmatmul.mubr.f32.gmra.mxu0 %v605
          %v718 = vpop.f32.mrf.mxu0
          %v719 = vadd.f32 %v601, %v718
          %v720 = vpop.f32.mrf.mxu0
          %721 = vmatprep.mubr.f32.mxu0 0.0
          %722 = vmatmul.mubr.f32.gmra.mxu0 %v608
          %v723 = vpop.f32.mrf.mxu0
          %v724 = vadd.f32 %v601, %v723
          %v725 = vpop.f32.mrf.mxu0
          %726 = vmatprep.mubr.f32.mxu0 0.0
          %727 = vmatmul.mubr.f32.gmra.mxu0 %v611
          %v728 = vpop.f32.mrf.mxu0
          %v729 = vadd.f32 %v601, %v728
          %v730 = vpop.f32.mrf.mxu0
          %731 = vmatprep.mubr.f32.mxu0 0.0
          %732 = vmatmul.mubr.f32.gmra.mxu0 %v614
          %v733 = vpop.f32.mrf.mxu0
          %v734 = vadd.f32 %v601, %v733
          %v735 = vpop.f32.mrf.mxu0
          %736 = vmatprep.mubr.f32.mxu0 0.0
          %737 = vmatmul.mubr.f32.gmra.mxu0 %v617
          %v738 = vpop.f32.mrf.mxu0
          %v739 = vadd.f32 %v601, %v738
          %v740 = vpop.f32.mrf.mxu0
          %741 = vmatprep.mubr.f32.mxu0 0.0
          %742 = vmatmul.mubr.f32.gmra.mxu0 %v620
          %v743 = vpop.f32.mrf.mxu0
          %v744 = vadd.f32 %v601, %v743
          %v745 = vpop.f32.mrf.mxu0
          %746 = vmatprep.mubr.f32.mxu0 0.0
          %747 = vmatmul.mubr.f32.gmra.mxu0 %v623
          %v748 = vpop.f32.mrf.mxu0
          %v749 = vadd.f32 %v601, %v748
          %v750 = vpop.f32.mrf.mxu0
          %751 = vmatprep.mubr.f32.mxu0 0.0
          %752 = vmatmul.mubr.f32.gmra.mxu0 %v626
          %v753 = vpop.f32.mrf.mxu0
          %v754 = vadd.f32 %v601, %v753
          %v755 = vpop.f32.mrf.mxu0
          %756 = vmatprep.mubr.f32.mxu0 0.0
          %757 = vmatmul.mubr.f32.gmra.mxu0 %v629
          %v758 = vpop.f32.mrf.mxu0
          %v759 = vadd.f32 %v601, %v758
          %v760 = vpop.f32.mrf.mxu0
          %761 = vmatprep.mubr.f32.mxu0 0.0
          %762 = vmatmul.mubr.f32.gmra.mxu0 %v632
          %v763 = vpop.f32.mrf.mxu0
          %v764 = vadd.f32 %v601, %v763
          %v765 = vpop.f32.mrf.mxu0
          %766 = vmatprep.mubr.f32.mxu0 0.0
          %767 = vmatmul.mubr.f32.gmra.mxu0 %v635
          %v768 = vpop.f32.mrf.mxu0
          %v769 = vadd.f32 %v601, %v768
          %v770 = vpop.f32.mrf.mxu0
          %771 = vmatprep.mubr.f32.mxu0 0.0
          %772 = vmatmul.mubr.f32.gmra.mxu0 %v638
          %v773 = vpop.f32.mrf.mxu0
          %v774 = vadd.f32 %v601, %v773
          %v775 = vpop.f32.mrf.mxu0
          %776 = vmatprep.mubr.f32.mxu0 0.0
          %777 = vmatmul.mubr.f32.gmra.mxu0 %v641
          %v778 = vpop.f32.mrf.mxu0
          %v779 = vadd.f32 %v601, %v778
          %v780 = vpop.f32.mrf.mxu0
          %781 = vmatprep.mubr.f32.mxu0 0.0
          %782 = vmatmul.mubr.f32.gmra.mxu0 %v644
          %v783 = vpop.f32.mrf.mxu0
          %v784 = vadd.f32 %v601, %v783
          %v785 = vpop.f32.mrf.mxu0
          %786 = vmatprep.mubr.f32.mxu0 0.0
          %787 = vmatmul.mubr.f32.gmra.mxu0 %v647
          %v788 = vpop.f32.mrf.mxu0
          %v789 = vadd.f32 %v601, %v788
          %v790 = vpop.f32.mrf.mxu0
          %791 = vmatprep.mubr.f32.mxu0 0.0
          %792 = vmatmul.mubr.f32.gmra.mxu0 %v650
          %v793 = vpop.f32.mrf.mxu0
          %v794 = vadd.f32 %v601, %v793
          %v795 = vpop.f32.mrf.mxu0
          %796 = vdwg.mxu0
          %v797 = vmax.f32 %v719, 0.0
          %v798 = vmax.f32 %v724, 0.0
          %v799 = vmax.f32 %v729, 0.0
          %v800 = vmax.f32 %v734, 0.0
          %v801 = vmax.f32 %v739, 0.0
          %v802 = vmax.f32 %v744, 0.0
          %v803 = vmax.f32 %v749, 0.0
          %v804 = vmax.f32 %v754, 0.0
          %v805 = vmax.f32 %v759, 0.0
          %v806 = vmax.f32 %v764, 0.0
          %v807 = vmax.f32 %v769, 0.0
          %v808 = vmax.f32 %v774, 0.0
          %v809 = vmax.f32 %v779, 0.0
          %v810 = vmax.f32 %v784, 0.0
          %v811 = vmax.f32 %v789, 0.0
          %v812 = vmax.f32 %v794, 0.0
          %813 = vst [vmem:[#allocation2] sm:$0xff] %v797
          %814 = vst [vmem:[#allocation2 + $0x8] sm:$0xff] %v798
          %815 = vst [vmem:[#allocation2 + $0x10] sm:$0xff] %v799
          %816 = vst [vmem:[#allocation2 + $0x18] sm:$0xff] %v800
          %817 = vst [vmem:[#allocation2 + $0x20] sm:$0xff] %v801
          %818 = vst [vmem:[#allocation2 + $0x28] sm:$0xff] %v802
          %819 = vst [vmem:[#allocation2 + $0x30] sm:$0xff] %v803
          %820 = vst [vmem:[#allocation2 + $0x38] sm:$0xff] %v804
          %821 = vst [vmem:[#allocation2 + $0x40] sm:$0xff] %v805
          %822 = vst [vmem:[#allocation2 + $0x48] sm:$0xff] %v806
          %823 = vst [vmem:[#allocation2 + $0x50] sm:$0xff] %v807
          %824 = vst [vmem:[#allocation2 + $0x58] sm:$0xff] %v808
          %825 = vst [vmem:[#allocation2 + $0x60] sm:$0xff] %v809
          %826 = vst [vmem:[#allocation2 + $0x68] sm:$0xff] %v810
          %827 = vst [vmem:[#allocation2 + $0x70] sm:$0xff] %v811
          %828 = vst [vmem:[#allocation2 + $0x78] sm:$0xff] %v812
          %829 = vst [vmem:[#allocation3] sm:$0xff] 0.0
          %830 = vst [vmem:[#allocation3 + $0x8] sm:$0xff] 0.0
          %831 = vst [vmem:[#allocation3 + $0x10] sm:$0xff] 0.0
          %832 = vst [vmem:[#allocation3 + $0x18] sm:$0xff] 0.0
          %833 = vst [vmem:[#allocation3 + $0x20] sm:$0xff] 0.0
          %834 = vst [vmem:[#allocation3 + $0x28] sm:$0xff] 0.0
          %835 = vst [vmem:[#allocation3 + $0x30] sm:$0xff] 0.0
          %836 = vst [vmem:[#allocation3 + $0x38] sm:$0xff] 0.0
          %837 = vst [vmem:[#allocation3 + $0x40] sm:$0xff] 0.0
          %838 = vst [vmem:[#allocation3 + $0x48] sm:$0xff] 0.0
          %839 = vst [vmem:[#allocation3 + $0x50] sm:$0xff] 0.0
          %840 = vst [vmem:[#allocation3 + $0x58] sm:$0xff] 0.0
          %841 = vst [vmem:[#allocation3 + $0x60] sm:$0xff] 0.0
          %842 = vst [vmem:[#allocation3 + $0x68] sm:$0xff] 0.0
          %843 = vst [vmem:[#allocation3 + $0x70] sm:$0xff] 0.0
          %844 = vst [vmem:[#allocation3 + $0x78] sm:$0xff] 0.0
          %vm845 = vcmask 7168
          %846 = vst.msk [vmem:[#allocation4] sm:$0xff] %vm845, 0.0
          %847 = vst.msk [vmem:[#allocation4 + $0x8] sm:$0xff] %vm845, 0.0
          %848 = vst.msk [vmem:[#allocation4 + $0x10] sm:$0xff] %vm845, 0.0
          %849 = vst.msk [vmem:[#allocation4 + $0x18] sm:$0xff] %vm845, 0.0
          %850 = vst.msk [vmem:[#allocation4 + $0x20] sm:$0xff] %vm845, 0.0
          %851 = vst.msk [vmem:[#allocation4 + $0x28] sm:$0xff] %vm845, 0.0
          %852 = vst.msk [vmem:[#allocation4 + $0x30] sm:$0xff] %vm845, 0.0
          %853 = vst.msk [vmem:[#allocation4 + $0x38] sm:$0xff] %vm845, 0.0
          %854 = vst.msk [vmem:[#allocation4 + $0x40] sm:$0xff] %vm845, 0.0
          %855 = vst.msk [vmem:[#allocation4 + $0x48] sm:$0xff] %vm845, 0.0
          %856 = vst.msk [vmem:[#allocation4 + $0x50] sm:$0xff] %vm845, 0.0
          %857 = vst.msk [vmem:[#allocation4 + $0x58] sm:$0xff] %vm845, 0.0
          %858 = vst.msk [vmem:[#allocation4 + $0x60] sm:$0xff] %vm845, 0.0
          %859 = vst.msk [vmem:[#allocation4 + $0x68] sm:$0xff] %vm845, 0.0
          %860 = vst.msk [vmem:[#allocation4 + $0x70] sm:$0xff] %vm845, 0.0
          %861 = vst.msk [vmem:[#allocation4 + $0x78] sm:$0xff] %vm845, 0.0
        $region106: #{tpu_custom_call.1} parent=89 // pred_fallthru
          _
        %v862 = vld [vmem:[#allocation2] sm:$0xff]
        %v863 = vld [vmem:[#allocation2 + $0x8] sm:$0xff]
        %v864 = vld [vmem:[#allocation2 + $0x10] sm:$0xff]
        %v865 = vld [vmem:[#allocation2 + $0x18] sm:$0xff]
        %v866 = vld [vmem:[#allocation2 + $0x20] sm:$0xff]
        %v867 = vld [vmem:[#allocation2 + $0x28] sm:$0xff]
        %v868 = vld [vmem:[#allocation2 + $0x30] sm:$0xff]
        %v869 = vld [vmem:[#allocation2 + $0x38] sm:$0xff]
        %v870 = vld [vmem:[#allocation2 + $0x40] sm:$0xff]
        %v871 = vld [vmem:[#allocation2 + $0x48] sm:$0xff]
        %v872 = vld [vmem:[#allocation2 + $0x50] sm:$0xff]
        %v873 = vld [vmem:[#allocation2 + $0x58] sm:$0xff]
        %v874 = vld [vmem:[#allocation2 + $0x60] sm:$0xff]
        %v875 = vld [vmem:[#allocation2 + $0x68] sm:$0xff]
        %v876 = vld [vmem:[#allocation2 + $0x70] sm:$0xff]
        %v877 = vld [vmem:[#allocation2 + $0x78] sm:$0xff]
        %v878 = vld [vmem:[%s489] sm:$0xff]
        %v879 = vld [vmem:[%s489 + $0x8] sm:$0xff]
        %v880 = vld [vmem:[%s489 + $0x10] sm:$0xff]
        %v881 = vld [vmem:[%s489 + $0x18] sm:$0xff]
        %v882 = vld [vmem:[%s489 + $0x20] sm:$0xff]
        %v883 = vld [vmem:[%s489 + $0x28] sm:$0xff]
        %v884 = vld [vmem:[%s489 + $0x30] sm:$0xff]
        %v885 = vld [vmem:[%s489 + $0x38] sm:$0xff]
        %v886 = vld [vmem:[%s489 + $0x40] sm:$0xff]
        %v887 = vld [vmem:[%s489 + $0x48] sm:$0xff]
        %v888 = vld [vmem:[%s489 + $0x50] sm:$0xff]
        %v889 = vld [vmem:[%s489 + $0x58] sm:$0xff]
        %v890 = vld [vmem:[%s489 + $0x60] sm:$0xff]
        %v891 = vld [vmem:[%s489 + $0x68] sm:$0xff]
        %v892 = vld [vmem:[%s489 + $0x70] sm:$0xff]
        %v893 = vld [vmem:[%s489 + $0x78] sm:$0xff]
        %v894 = vld [vmem:[%s563] sm:$0x1]
        %v896 = vlaneseq
        %v897 = vshrl.u32 %v896, 7
        %v898 = vsub.s32 0, %v897
        %v899 = vrot.slane %v894, %v898
        %901 = vmatprep.subr.mxu0 0.0
        %902 = vmatpush1.msra.mxu0 %v893
        %903 = vmatprep.subr.mxu0 0.0
        %904 = vmatpush1.msra.mxu0 %v892
        %905 = vmatprep.subr.mxu0 0.0
        %906 = vmatpush1.msra.mxu0 %v891
        %907 = vmatprep.subr.mxu0 0.0
        %908 = vmatpush1.msra.mxu0 %v890
        %909 = vmatprep.subr.mxu0 0.0
        %910 = vmatpush1.msra.mxu0 %v889
        %911 = vmatprep.subr.mxu0 0.0
        %912 = vmatpush1.msra.mxu0 %v888
        %913 = vmatprep.subr.mxu0 0.0
        %914 = vmatpush1.msra.mxu0 %v887
        %915 = vmatprep.subr.mxu0 0.0
        %916 = vmatpush1.msra.mxu0 %v886
        %917 = vmatprep.subr.mxu0 0.0
        %918 = vmatpush1.msra.mxu0 %v885
        %919 = vmatprep.subr.mxu0 0.0
        %920 = vmatpush1.msra.mxu0 %v884
        %921 = vmatprep.subr.mxu0 0.0
        %922 = vmatpush1.msra.mxu0 %v883
        %923 = vmatprep.subr.mxu0 0.0
        %924 = vmatpush1.msra.mxu0 %v882
        %925 = vmatprep.subr.mxu0 0.0
        %926 = vmatpush1.msra.mxu0 %v881
        %927 = vmatprep.subr.mxu0 0.0
        %928 = vmatpush1.msra.mxu0 %v880
        %929 = vmatprep.subr.mxu0 0.0
        %930 = vmatpush1.msra.mxu0 %v879
        %931 = vmatprep.subr.mxu0 0.0
        %932 = vmatpush1.msra.mxu0 %v878
        %933 = vmatprep.subr.mxu0 0.0
        %934 = vmatpush2.msra.mxu0 0.0
        %935 = vmatprep.subr.mxu0 0.0
        %936 = vmatpush2.msra.mxu0 0.0
        %937 = vmatprep.subr.mxu0 0.0
        %938 = vmatpush2.msra.mxu0 0.0
        %939 = vmatprep.subr.mxu0 0.0
        %940 = vmatpush2.msra.mxu0 0.0
        %941 = vmatprep.subr.mxu0 0.0
        %942 = vmatpush2.msra.mxu0 0.0
        %943 = vmatprep.subr.mxu0 0.0
        %944 = vmatpush2.msra.mxu0 0.0
        %945 = vmatprep.subr.mxu0 0.0
        %946 = vmatpush2.msra.mxu0 0.0
        %947 = vmatprep.subr.mxu0 0.0
        %948 = vmatpush2.msra.mxu0 0.0
        %949 = vmatprep.subr.mxu0 0.0
        %950 = vmatpush2.msra.mxu0 0.0
        %951 = vmatprep.subr.mxu0 0.0
        %952 = vmatpush2.msra.mxu0 0.0
        %953 = vmatprep.subr.mxu0 0.0
        %954 = vmatpush2.msra.mxu0 0.0
        %955 = vmatprep.subr.mxu0 0.0
        %956 = vmatpush2.msra.mxu0 0.0
        %957 = vmatprep.subr.mxu0 0.0
        %958 = vmatpush2.msra.mxu0 0.0
        %959 = vmatprep.subr.mxu0 0.0
        %960 = vmatpush2.msra.mxu0 0.0
        %961 = vmatprep.subr.mxu0 0.0
        %962 = vmatpush2.msra.mxu0 0.0
        %963 = vmatprep.subr.mxu0 0.0
        %964 = vmatpush2.msra.mxu0 0.0
        %965 = vmatprep.mubr.f32.mxu0 0.0
        %966 = vmatmul.mubr.f32.gmra.mxu0 %v862
        %v967 = vpop.f32.mrf.mxu0
        %v968 = vadd.f32 %v899, %v967
        %v969 = vpop.f32.mrf.mxu0
        %970 = vmatprep.mubr.f32.mxu0 0.0
        %971 = vmatmul.mubr.f32.gmra.mxu0 %v863
        %v972 = vpop.f32.mrf.mxu0
        %v973 = vadd.f32 %v899, %v972
        %v974 = vpop.f32.mrf.mxu0
        %975 = vmatprep.mubr.f32.mxu0 0.0
        %976 = vmatmul.mubr.f32.gmra.mxu0 %v864
        %v977 = vpop.f32.mrf.mxu0
        %v978 = vadd.f32 %v899, %v977
        %v979 = vpop.f32.mrf.mxu0
        %980 = vmatprep.mubr.f32.mxu0 0.0
        %981 = vmatmul.mubr.f32.gmra.mxu0 %v865
        %v982 = vpop.f32.mrf.mxu0
        %v983 = vadd.f32 %v899, %v982
        %v984 = vpop.f32.mrf.mxu0
        %985 = vmatprep.mubr.f32.mxu0 0.0
        %986 = vmatmul.mubr.f32.gmra.mxu0 %v866
        %v987 = vpop.f32.mrf.mxu0
        %v988 = vadd.f32 %v899, %v987
        %v989 = vpop.f32.mrf.mxu0
        %990 = vmatprep.mubr.f32.mxu0 0.0
        %991 = vmatmul.mubr.f32.gmra.mxu0 %v867
        %v992 = vpop.f32.mrf.mxu0
        %v993 = vadd.f32 %v899, %v992
        %v994 = vpop.f32.mrf.mxu0
        %995 = vmatprep.mubr.f32.mxu0 0.0
        %996 = vmatmul.mubr.f32.gmra.mxu0 %v868
        %v997 = vpop.f32.mrf.mxu0
        %v998 = vadd.f32 %v899, %v997
        %v999 = vpop.f32.mrf.mxu0
        %1000 = vmatprep.mubr.f32.mxu0 0.0
        %1001 = vmatmul.mubr.f32.gmra.mxu0 %v869
        %v1002 = vpop.f32.mrf.mxu0
        %v1003 = vadd.f32 %v899, %v1002
        %v1004 = vpop.f32.mrf.mxu0
        %1005 = vmatprep.mubr.f32.mxu0 0.0
        %1006 = vmatmul.mubr.f32.gmra.mxu0 %v870
        %v1007 = vpop.f32.mrf.mxu0
        %v1008 = vadd.f32 %v899, %v1007
        %v1009 = vpop.f32.mrf.mxu0
        %1010 = vmatprep.mubr.f32.mxu0 0.0
        %1011 = vmatmul.mubr.f32.gmra.mxu0 %v871
        %v1012 = vpop.f32.mrf.mxu0
        %v1013 = vadd.f32 %v899, %v1012
        %v1014 = vpop.f32.mrf.mxu0
        %1015 = vmatprep.mubr.f32.mxu0 0.0
        %1016 = vmatmul.mubr.f32.gmra.mxu0 %v872
        %v1017 = vpop.f32.mrf.mxu0
        %v1018 = vadd.f32 %v899, %v1017
        %v1019 = vpop.f32.mrf.mxu0
        %1020 = vmatprep.mubr.f32.mxu0 0.0
        %1021 = vmatmul.mubr.f32.gmra.mxu0 %v873
        %v1022 = vpop.f32.mrf.mxu0
        %v1023 = vadd.f32 %v899, %v1022
        %v1024 = vpop.f32.mrf.mxu0
        %1025 = vmatprep.mubr.f32.mxu0 0.0
        %1026 = vmatmul.mubr.f32.gmra.mxu0 %v874
        %v1027 = vpop.f32.mrf.mxu0
        %v1028 = vadd.f32 %v899, %v1027
        %v1029 = vpop.f32.mrf.mxu0
        %1030 = vmatprep.mubr.f32.mxu0 0.0
        %1031 = vmatmul.mubr.f32.gmra.mxu0 %v875
        %v1032 = vpop.f32.mrf.mxu0
        %v1033 = vadd.f32 %v899, %v1032
        %v1034 = vpop.f32.mrf.mxu0
        %1035 = vmatprep.mubr.f32.mxu0 0.0
        %1036 = vmatmul.mubr.f32.gmra.mxu0 %v876
        %v1037 = vpop.f32.mrf.mxu0
        %v1038 = vadd.f32 %v899, %v1037
        %v1039 = vpop.f32.mrf.mxu0
        %1040 = vmatprep.mubr.f32.mxu0 0.0
        %1041 = vmatmul.mubr.f32.gmra.mxu0 %v877
        %v1042 = vpop.f32.mrf.mxu0
        %v1043 = vadd.f32 %v899, %v1042
        %v1044 = vpop.f32.mrf.mxu0
        %1045 = vdwg.mxu0
        %v1046 = vld [vmem:[#allocation4] sm:$0xff]
        %v1047 = vld [vmem:[#allocation4 + $0x8] sm:$0xff]
        %v1048 = vld [vmem:[#allocation4 + $0x10] sm:$0xff]
        %v1049 = vld [vmem:[#allocation4 + $0x18] sm:$0xff]
        %v1050 = vld [vmem:[#allocation4 + $0x20] sm:$0xff]
        %v1051 = vld [vmem:[#allocation4 + $0x28] sm:$0xff]
        %v1052 = vld [vmem:[#allocation4 + $0x30] sm:$0xff]
        %v1053 = vld [vmem:[#allocation4 + $0x38] sm:$0xff]
        %v1054 = vld [vmem:[#allocation4 + $0x40] sm:$0xff]
        %v1055 = vld [vmem:[#allocation4 + $0x48] sm:$0xff]
        %v1056 = vld [vmem:[#allocation4 + $0x50] sm:$0xff]
        %v1057 = vld [vmem:[#allocation4 + $0x58] sm:$0xff]
        %v1058 = vld [vmem:[#allocation4 + $0x60] sm:$0xff]
        %v1059 = vld [vmem:[#allocation4 + $0x68] sm:$0xff]
        %v1060 = vld [vmem:[#allocation4 + $0x70] sm:$0xff]
        %v1061 = vld [vmem:[#allocation4 + $0x78] sm:$0xff]
        %v1062 = vand.u32 2147483647, %v968
        %v1063 = vand.u32 2147483647, %v973
        %v1064 = vand.u32 2147483647, %v978
        %v1065 = vand.u32 2147483647, %v983
        %v1066 = vand.u32 2147483647, %v988
        %v1067 = vand.u32 2147483647, %v993
        %v1068 = vand.u32 2147483647, %v998
        %v1069 = vand.u32 2147483647, %v1003
        %v1070 = vand.u32 2147483647, %v1008
        %v1071 = vand.u32 2147483647, %v1013
        %v1072 = vand.u32 2147483647, %v1018
        %v1073 = vand.u32 2147483647, %v1023
        %v1074 = vand.u32 2147483647, %v1028
        %v1075 = vand.u32 2147483647, %v1033
        %v1076 = vand.u32 2147483647, %v1038
        %v1077 = vand.u32 2147483647, %v1043
        %1078 = vadd.xlane.f32.xlu0 %v1062
        %v1079 = vpop.xlane.xlu0 %1078
        %1080 = vadd.xlane.f32.xlu0 %v1063
        %v1081 = vpop.xlane.xlu0 %1080
        %1082 = vadd.xlane.f32.xlu0 %v1064
        %v1083 = vpop.xlane.xlu0 %1082
        %1084 = vadd.xlane.f32.xlu0 %v1065
        %v1085 = vpop.xlane.xlu0 %1084
        %1086 = vadd.xlane.f32.xlu0 %v1066
        %v1087 = vpop.xlane.xlu0 %1086
        %1088 = vadd.xlane.f32.xlu0 %v1067
        %v1089 = vpop.xlane.xlu0 %1088
        %1090 = vadd.xlane.f32.xlu0 %v1068
        %v1091 = vpop.xlane.xlu0 %1090
        %1092 = vadd.xlane.f32.xlu0 %v1069
        %v1093 = vpop.xlane.xlu0 %1092
        %1094 = vadd.xlane.f32.xlu0 %v1070
        %v1095 = vpop.xlane.xlu0 %1094
        %1096 = vadd.xlane.f32.xlu0 %v1071
        %v1097 = vpop.xlane.xlu0 %1096
        %1098 = vadd.xlane.f32.xlu0 %v1072
        %v1099 = vpop.xlane.xlu0 %1098
        %1100 = vadd.xlane.f32.xlu0 %v1073
        %v1101 = vpop.xlane.xlu0 %1100
        %1102 = vadd.xlane.f32.xlu0 %v1074
        %v1103 = vpop.xlane.xlu0 %1102
        %1104 = vadd.xlane.f32.xlu0 %v1075
        %v1105 = vpop.xlane.xlu0 %1104
        %1106 = vadd.xlane.f32.xlu0 %v1076
        %v1107 = vpop.xlane.xlu0 %1106
        %1108 = vadd.xlane.f32.xlu0 %v1077
        %v1109 = vpop.xlane.xlu0 %1108
        %v1110 = vadd.f32 %v1046, %v1079
        %v1111 = vadd.f32 %v1047, %v1081
        %v1112 = vadd.f32 %v1048, %v1083
        %v1113 = vadd.f32 %v1049, %v1085
        %v1114 = vadd.f32 %v1050, %v1087
        %v1115 = vadd.f32 %v1051, %v1089
        %v1116 = vadd.f32 %v1052, %v1091
        %v1117 = vadd.f32 %v1053, %v1093
        %v1118 = vadd.f32 %v1054, %v1095
        %v1119 = vadd.f32 %v1055, %v1097
        %v1120 = vadd.f32 %v1056, %v1099
        %v1121 = vadd.f32 %v1057, %v1101
        %v1122 = vadd.f32 %v1058, %v1103
        %v1123 = vadd.f32 %v1059, %v1105
        %v1124 = vadd.f32 %v1060, %v1107
        %v1125 = vadd.f32 %v1061, %v1109
        %vm1126 = vcmask 7168
        %1127 = vst.msk [vmem:[#allocation4] sm:$0xff] %vm1126, %v1110
        %1128 = vst.msk [vmem:[#allocation4 + $0x8] sm:$0xff] %vm1126, %v1111
        %1129 = vst.msk [vmem:[#allocation4 + $0x10] sm:$0xff] %vm1126, %v1112
        %1130 = vst.msk [vmem:[#allocation4 + $0x18] sm:$0xff] %vm1126, %v1113
        %1131 = vst.msk [vmem:[#allocation4 + $0x20] sm:$0xff] %vm1126, %v1114
        %1132 = vst.msk [vmem:[#allocation4 + $0x28] sm:$0xff] %vm1126, %v1115
        %1133 = vst.msk [vmem:[#allocation4 + $0x30] sm:$0xff] %vm1126, %v1116
        %1134 = vst.msk [vmem:[#allocation4 + $0x38] sm:$0xff] %vm1126, %v1117
        %1135 = vst.msk [vmem:[#allocation4 + $0x40] sm:$0xff] %vm1126, %v1118
        %1136 = vst.msk [vmem:[#allocation4 + $0x48] sm:$0xff] %vm1126, %v1119
        %1137 = vst.msk [vmem:[#allocation4 + $0x50] sm:$0xff] %vm1126, %v1120
        %1138 = vst.msk [vmem:[#allocation4 + $0x58] sm:$0xff] %vm1126, %v1121
        %1139 = vst.msk [vmem:[#allocation4 + $0x60] sm:$0xff] %vm1126, %v1122
        %1140 = vst.msk [vmem:[#allocation4 + $0x68] sm:$0xff] %vm1126, %v1123
        %1141 = vst.msk [vmem:[#allocation4 + $0x70] sm:$0xff] %vm1126, %v1124
        %1142 = vst.msk [vmem:[#allocation4 + $0x78] sm:$0xff] %vm1126, %v1125
        %v1143 = vld [vmem:[#allocation3] sm:$0xff]
        %v1144 = vld [vmem:[#allocation3 + $0x8] sm:$0xff]
        %v1145 = vld [vmem:[#allocation3 + $0x10] sm:$0xff]
        %v1146 = vld [vmem:[#allocation3 + $0x18] sm:$0xff]
        %v1147 = vld [vmem:[#allocation3 + $0x20] sm:$0xff]
        %v1148 = vld [vmem:[#allocation3 + $0x28] sm:$0xff]
        %v1149 = vld [vmem:[#allocation3 + $0x30] sm:$0xff]
        %v1150 = vld [vmem:[#allocation3 + $0x38] sm:$0xff]
        %v1151 = vld [vmem:[#allocation3 + $0x40] sm:$0xff]
        %v1152 = vld [vmem:[#allocation3 + $0x48] sm:$0xff]
        %v1153 = vld [vmem:[#allocation3 + $0x50] sm:$0xff]
        %v1154 = vld [vmem:[#allocation3 + $0x58] sm:$0xff]
        %v1155 = vld [vmem:[#allocation3 + $0x60] sm:$0xff]
        %v1156 = vld [vmem:[#allocation3 + $0x68] sm:$0xff]
        %v1157 = vld [vmem:[#allocation3 + $0x70] sm:$0xff]
        %v1158 = vld [vmem:[#allocation3 + $0x78] sm:$0xff]
        %v1159 = vld [vmem:[%s497] sm:$0xff]
        %v1160 = vld [vmem:[%s497 + $0x8] sm:$0xff]
        %v1161 = vld [vmem:[%s497 + $0x10] sm:$0xff]
        %v1162 = vld [vmem:[%s497 + $0x18] sm:$0xff]
        %v1163 = vld [vmem:[%s497 + $0x20] sm:$0xff]
        %v1164 = vld [vmem:[%s497 + $0x28] sm:$0xff]
        %v1165 = vld [vmem:[%s497 + $0x30] sm:$0xff]
        %v1166 = vld [vmem:[%s497 + $0x38] sm:$0xff]
        %v1167 = vld [vmem:[%s497 + $0x40] sm:$0xff]
        %v1168 = vld [vmem:[%s497 + $0x48] sm:$0xff]
        %v1169 = vld [vmem:[%s497 + $0x50] sm:$0xff]
        %v1170 = vld [vmem:[%s497 + $0x58] sm:$0xff]
        %v1171 = vld [vmem:[%s497 + $0x60] sm:$0xff]
        %v1172 = vld [vmem:[%s497 + $0x68] sm:$0xff]
        %v1173 = vld [vmem:[%s497 + $0x70] sm:$0xff]
        %v1174 = vld [vmem:[%s497 + $0x78] sm:$0xff]
        %1175 = vmatprep.subr.mxu0 0.0
        %1176 = vmatpush1.msra.mxu0 %v1174
        %1177 = vmatprep.subr.mxu0 0.0
        %1178 = vmatpush1.msra.mxu0 %v1173
        %1179 = vmatprep.subr.mxu0 0.0
        %1180 = vmatpush1.msra.mxu0 %v1172
        %1181 = vmatprep.subr.mxu0 0.0
        %1182 = vmatpush1.msra.mxu0 %v1171
        %1183 = vmatprep.subr.mxu0 0.0
        %1184 = vmatpush1.msra.mxu0 %v1170
        %1185 = vmatprep.subr.mxu0 0.0
        %1186 = vmatpush1.msra.mxu0 %v1169
        %1187 = vmatprep.subr.mxu0 0.0
        %1188 = vmatpush1.msra.mxu0 %v1168
        %1189 = vmatprep.subr.mxu0 0.0
        %1190 = vmatpush1.msra.mxu0 %v1167
        %1191 = vmatprep.subr.mxu0 0.0
        %1192 = vmatpush1.msra.mxu0 %v1166
        %1193 = vmatprep.subr.mxu0 0.0
        %1194 = vmatpush1.msra.mxu0 %v1165
        %1195 = vmatprep.subr.mxu0 0.0
        %1196 = vmatpush1.msra.mxu0 %v1164
        %1197 = vmatprep.subr.mxu0 0.0
        %1198 = vmatpush1.msra.mxu0 %v1163
        %1199 = vmatprep.subr.mxu0 0.0
        %1200 = vmatpush1.msra.mxu0 %v1162
        %1201 = vmatprep.subr.mxu0 0.0
        %1202 = vmatpush1.msra.mxu0 %v1161
        %1203 = vmatprep.subr.mxu0 0.0
        %1204 = vmatpush1.msra.mxu0 %v1160
        %1205 = vmatprep.subr.mxu0 0.0
        %1206 = vmatpush1.msra.mxu0 %v1159
        %1207 = vmatprep.subr.mxu0 0.0
        %1208 = vmatpush2.msra.mxu0 0.0
        %1209 = vmatprep.subr.mxu0 0.0
        %1210 = vmatpush2.msra.mxu0 0.0
        %1211 = vmatprep.subr.mxu0 0.0
        %1212 = vmatpush2.msra.mxu0 0.0
        %1213 = vmatprep.subr.mxu0 0.0
        %1214 = vmatpush2.msra.mxu0 0.0
        %1215 = vmatprep.subr.mxu0 0.0
        %1216 = vmatpush2.msra.mxu0 0.0
        %1217 = vmatprep.subr.mxu0 0.0
        %1218 = vmatpush2.msra.mxu0 0.0
        %1219 = vmatprep.subr.mxu0 0.0
        %1220 = vmatpush2.msra.mxu0 0.0
        %1221 = vmatprep.subr.mxu0 0.0
        %1222 = vmatpush2.msra.mxu0 0.0
        %1223 = vmatprep.subr.mxu0 0.0
        %1224 = vmatpush2.msra.mxu0 0.0
        %1225 = vmatprep.subr.mxu0 0.0
        %1226 = vmatpush2.msra.mxu0 0.0
        %1227 = vmatprep.subr.mxu0 0.0
        %1228 = vmatpush2.msra.mxu0 0.0
        %1229 = vmatprep.subr.mxu0 0.0
        %1230 = vmatpush2.msra.mxu0 0.0
        %1231 = vmatprep.subr.mxu0 0.0
        %1232 = vmatpush2.msra.mxu0 0.0
        %1233 = vmatprep.subr.mxu0 0.0
        %1234 = vmatpush2.msra.mxu0 0.0
        %1235 = vmatprep.subr.mxu0 0.0
        %1236 = vmatpush2.msra.mxu0 0.0
        %1237 = vmatprep.subr.mxu0 0.0
        %1238 = vmatpush2.msra.mxu0 0.0
        %1239 = vmatprep.mubr.f32.mxu0 0.0
        %1240 = vmatmul.mubr.f32.gmra.mxu0 %v968
        %v1241 = vpop.f32.mrf.mxu0
        %v1242 = vadd.f32 0.0, %v1241
        %v1243 = vpop.f32.mrf.mxu0
        %1244 = vmatprep.mubr.f32.mxu0 0.0
        %1245 = vmatmul.mubr.f32.gmra.mxu0 %v973
        %v1246 = vpop.f32.mrf.mxu0
        %v1247 = vadd.f32 0.0, %v1246
        %v1248 = vpop.f32.mrf.mxu0
        %1249 = vmatprep.mubr.f32.mxu0 0.0
        %1250 = vmatmul.mubr.f32.gmra.mxu0 %v978
        %v1251 = vpop.f32.mrf.mxu0
        %v1252 = vadd.f32 0.0, %v1251
        %v1253 = vpop.f32.mrf.mxu0
        %1254 = vmatprep.mubr.f32.mxu0 0.0
        %1255 = vmatmul.mubr.f32.gmra.mxu0 %v983
        %v1256 = vpop.f32.mrf.mxu0
        %v1257 = vadd.f32 0.0, %v1256
        %v1258 = vpop.f32.mrf.mxu0
        %1259 = vmatprep.mubr.f32.mxu0 0.0
        %1260 = vmatmul.mubr.f32.gmra.mxu0 %v988
        %v1261 = vpop.f32.mrf.mxu0
        %v1262 = vadd.f32 0.0, %v1261
        %v1263 = vpop.f32.mrf.mxu0
        %1264 = vmatprep.mubr.f32.mxu0 0.0
        %1265 = vmatmul.mubr.f32.gmra.mxu0 %v993
        %v1266 = vpop.f32.mrf.mxu0
        %v1267 = vadd.f32 0.0, %v1266
        %v1268 = vpop.f32.mrf.mxu0
        %1269 = vmatprep.mubr.f32.mxu0 0.0
        %1270 = vmatmul.mubr.f32.gmra.mxu0 %v998
        %v1271 = vpop.f32.mrf.mxu0
        %v1272 = vadd.f32 0.0, %v1271
        %v1273 = vpop.f32.mrf.mxu0
        %1274 = vmatprep.mubr.f32.mxu0 0.0
        %1275 = vmatmul.mubr.f32.gmra.mxu0 %v1003
        %v1276 = vpop.f32.mrf.mxu0
        %v1277 = vadd.f32 0.0, %v1276
        %v1278 = vpop.f32.mrf.mxu0
        %1279 = vmatprep.mubr.f32.mxu0 0.0
        %1280 = vmatmul.mubr.f32.gmra.mxu0 %v1008
        %v1281 = vpop.f32.mrf.mxu0
        %v1282 = vadd.f32 0.0, %v1281
        %v1283 = vpop.f32.mrf.mxu0
        %1284 = vmatprep.mubr.f32.mxu0 0.0
        %1285 = vmatmul.mubr.f32.gmra.mxu0 %v1013
        %v1286 = vpop.f32.mrf.mxu0
        %v1287 = vadd.f32 0.0, %v1286
        %v1288 = vpop.f32.mrf.mxu0
        %1289 = vmatprep.mubr.f32.mxu0 0.0
        %1290 = vmatmul.mubr.f32.gmra.mxu0 %v1018
        %v1291 = vpop.f32.mrf.mxu0
        %v1292 = vadd.f32 0.0, %v1291
        %v1293 = vpop.f32.mrf.mxu0
        %1294 = vmatprep.mubr.f32.mxu0 0.0
        %1295 = vmatmul.mubr.f32.gmra.mxu0 %v1023
        %v1296 = vpop.f32.mrf.mxu0
        %v1297 = vadd.f32 0.0, %v1296
        %v1298 = vpop.f32.mrf.mxu0
        %1299 = vmatprep.mubr.f32.mxu0 0.0
        %1300 = vmatmul.mubr.f32.gmra.mxu0 %v1028
        %v1301 = vpop.f32.mrf.mxu0
        %v1302 = vadd.f32 0.0, %v1301
        %v1303 = vpop.f32.mrf.mxu0
        %1304 = vmatprep.mubr.f32.mxu0 0.0
        %1305 = vmatmul.mubr.f32.gmra.mxu0 %v1033
        %v1306 = vpop.f32.mrf.mxu0
        %v1307 = vadd.f32 0.0, %v1306
        %v1308 = vpop.f32.mrf.mxu0
        %1309 = vmatprep.mubr.f32.mxu0 0.0
        %1310 = vmatmul.mubr.f32.gmra.mxu0 %v1038
        %v1311 = vpop.f32.mrf.mxu0
        %v1312 = vadd.f32 0.0, %v1311
        %v1313 = vpop.f32.mrf.mxu0
        %1314 = vmatprep.mubr.f32.mxu0 0.0
        %1315 = vmatmul.mubr.f32.gmra.mxu0 %v1043
        %v1316 = vpop.f32.mrf.mxu0
        %v1317 = vadd.f32 0.0, %v1316
        %v1318 = vpop.f32.mrf.mxu0
        %1319 = vdwg.mxu0
        %v1320 = vadd.f32 %v1143, %v1242
        %v1321 = vadd.f32 %v1144, %v1247
        %v1322 = vadd.f32 %v1145, %v1252
        %v1323 = vadd.f32 %v1146, %v1257
        %v1324 = vadd.f32 %v1147, %v1262
        %v1325 = vadd.f32 %v1148, %v1267
        %v1326 = vadd.f32 %v1149, %v1272
        %v1327 = vadd.f32 %v1150, %v1277
        %v1328 = vadd.f32 %v1151, %v1282
        %v1329 = vadd.f32 %v1152, %v1287
        %v1330 = vadd.f32 %v1153, %v1292
        %v1331 = vadd.f32 %v1154, %v1297
        %v1332 = vadd.f32 %v1155, %v1302
        %v1333 = vadd.f32 %v1156, %v1307
        %v1334 = vadd.f32 %v1157, %v1312
        %v1335 = vadd.f32 %v1158, %v1317
        %1336 = vst [vmem:[#allocation3] sm:$0xff] %v1320
        %1337 = vst [vmem:[#allocation3 + $0x8] sm:$0xff] %v1321
        %1338 = vst [vmem:[#allocation3 + $0x10] sm:$0xff] %v1322
        %1339 = vst [vmem:[#allocation3 + $0x18] sm:$0xff] %v1323
        %1340 = vst [vmem:[#allocation3 + $0x20] sm:$0xff] %v1324
        %1341 = vst [vmem:[#allocation3 + $0x28] sm:$0xff] %v1325
        %1342 = vst [vmem:[#allocation3 + $0x30] sm:$0xff] %v1326
        %1343 = vst [vmem:[#allocation3 + $0x38] sm:$0xff] %v1327
        %1344 = vst [vmem:[#allocation3 + $0x40] sm:$0xff] %v1328
        %1345 = vst [vmem:[#allocation3 + $0x48] sm:$0xff] %v1329
        %1346 = vst [vmem:[#allocation3 + $0x50] sm:$0xff] %v1330
        %1347 = vst [vmem:[#allocation3 + $0x58] sm:$0xff] %v1331
        %1348 = vst [vmem:[#allocation3 + $0x60] sm:$0xff] %v1332
        %1349 = vst [vmem:[#allocation3 + $0x68] sm:$0xff] %v1333
        %1350 = vst [vmem:[#allocation3 + $0x70] sm:$0xff] %v1334
        %1351 = vst [vmem:[#allocation3 + $0x78] sm:$0xff] %v1335
        %p1352 = scmp.eq.s32.totalorder %s34, 1
        // Predicated region
        $region107: #{tpu_custom_call.1} parent=89 // pred_check
          %p1353 = pneg %p1352
        $region108: #{tpu_custom_call.1} parent=89 // pred_check_branch
          %1355 = sbr.rel (%p1353) target = $region110
        $region109: #{tpu_custom_call.1} parent=89 // pred_region
          %v1356 = vld [vmem:[#allocation3] sm:$0xff]
          %v1357 = vld [vmem:[#allocation3 + $0x8] sm:$0xff]
          %v1358 = vld [vmem:[#allocation3 + $0x10] sm:$0xff]
          %v1359 = vld [vmem:[#allocation3 + $0x18] sm:$0xff]
          %v1360 = vld [vmem:[#allocation3 + $0x20] sm:$0xff]
          %v1361 = vld [vmem:[#allocation3 + $0x28] sm:$0xff]
          %v1362 = vld [vmem:[#allocation3 + $0x30] sm:$0xff]
          %v1363 = vld [vmem:[#allocation3 + $0x38] sm:$0xff]
          %v1364 = vld [vmem:[#allocation3 + $0x40] sm:$0xff]
          %v1365 = vld [vmem:[#allocation3 + $0x48] sm:$0xff]
          %v1366 = vld [vmem:[#allocation3 + $0x50] sm:$0xff]
          %v1367 = vld [vmem:[#allocation3 + $0x58] sm:$0xff]
          %v1368 = vld [vmem:[#allocation3 + $0x60] sm:$0xff]
          %v1369 = vld [vmem:[#allocation3 + $0x68] sm:$0xff]
          %v1370 = vld [vmem:[#allocation3 + $0x70] sm:$0xff]
          %v1371 = vld [vmem:[#allocation3 + $0x78] sm:$0xff]
          %v1372 = vld [vmem:[%s6] sm:$0x1]
          %v1374 = vlaneseq
          %v1375 = vshrl.u32 %v1374, 7
          %v1376 = vsub.s32 0, %v1375
          %v1377 = vrot.slane %v1372, %v1376
          %v1379 = vadd.f32 %v1356, %v1377
          %v1380 = vadd.f32 %v1357, %v1377
          %v1381 = vadd.f32 %v1358, %v1377
          %v1382 = vadd.f32 %v1359, %v1377
          %v1383 = vadd.f32 %v1360, %v1377
          %v1384 = vadd.f32 %v1361, %v1377
          %v1385 = vadd.f32 %v1362, %v1377
          %v1386 = vadd.f32 %v1363, %v1377
          %v1387 = vadd.f32 %v1364, %v1377
          %v1388 = vadd.f32 %v1365, %v1377
          %v1389 = vadd.f32 %v1366, %v1377
          %v1390 = vadd.f32 %v1367, %v1377
          %v1391 = vadd.f32 %v1368, %v1377
          %v1392 = vadd.f32 %v1369, %v1377
          %v1393 = vadd.f32 %v1370, %v1377
          %v1394 = vadd.f32 %v1371, %v1377
          %v1395 = vmax.f32 %v1379, 0.0
          %v1396 = vmax.f32 %v1380, 0.0
          %v1397 = vmax.f32 %v1381, 0.0
          %v1398 = vmax.f32 %v1382, 0.0
          %v1399 = vmax.f32 %v1383, 0.0
          %v1400 = vmax.f32 %v1384, 0.0
          %v1401 = vmax.f32 %v1385, 0.0
          %v1402 = vmax.f32 %v1386, 0.0
          %v1403 = vmax.f32 %v1387, 0.0
          %v1404 = vmax.f32 %v1388, 0.0
          %v1405 = vmax.f32 %v1389, 0.0
          %v1406 = vmax.f32 %v1390, 0.0
          %v1407 = vmax.f32 %v1391, 0.0
          %v1408 = vmax.f32 %v1392, 0.0
          %v1409 = vmax.f32 %v1393, 0.0
          %v1410 = vmax.f32 %v1394, 0.0
          %v1411 = vld [vmem:[#allocation9] sm:$0xff]
          %v1412 = vld [vmem:[#allocation9 + $0x8] sm:$0xff]
          %v1413 = vld [vmem:[#allocation9 + $0x10] sm:$0xff]
          %v1414 = vld [vmem:[#allocation9 + $0x18] sm:$0xff]
          %v1415 = vld [vmem:[#allocation9 + $0x20] sm:$0xff]
          %v1416 = vld [vmem:[#allocation9 + $0x28] sm:$0xff]
          %v1417 = vld [vmem:[#allocation9 + $0x30] sm:$0xff]
          %v1418 = vld [vmem:[#allocation9 + $0x38] sm:$0xff]
          %v1419 = vld [vmem:[#allocation9 + $0x40] sm:$0xff]
          %v1420 = vld [vmem:[#allocation9 + $0x48] sm:$0xff]
          %v1421 = vld [vmem:[#allocation9 + $0x50] sm:$0xff]
          %v1422 = vld [vmem:[#allocation9 + $0x58] sm:$0xff]
          %v1423 = vld [vmem:[#allocation9 + $0x60] sm:$0xff]
          %v1424 = vld [vmem:[#allocation9 + $0x68] sm:$0xff]
          %v1425 = vld [vmem:[#allocation9 + $0x70] sm:$0xff]
          %v1426 = vld [vmem:[#allocation9 + $0x78] sm:$0xff]
          %v1427 = vld [vmem:[%s8] sm:$0x1]
          %v1429 = vlaneseq
          %v1430 = vshrl.u32 %v1429, 7
          %v1431 = vsub.s32 0, %v1430
          %v1432 = vrot.slane %v1427, %v1431
          %1434 = vmatprep.subr.mxu0 0.0
          %1435 = vmatpush1.msra.mxu0 %v1426
          %1436 = vmatprep.subr.mxu0 0.0
          %1437 = vmatpush1.msra.mxu0 %v1425
          %1438 = vmatprep.subr.mxu0 0.0
          %1439 = vmatpush1.msra.mxu0 %v1424
          %1440 = vmatprep.subr.mxu0 0.0
          %1441 = vmatpush1.msra.mxu0 %v1423
          %1442 = vmatprep.subr.mxu0 0.0
          %1443 = vmatpush1.msra.mxu0 %v1422
          %1444 = vmatprep.subr.mxu0 0.0
          %1445 = vmatpush1.msra.mxu0 %v1421
          %1446 = vmatprep.subr.mxu0 0.0
          %1447 = vmatpush1.msra.mxu0 %v1420
          %1448 = vmatprep.subr.mxu0 0.0
          %1449 = vmatpush1.msra.mxu0 %v1419
          %1450 = vmatprep.subr.mxu0 0.0
          %1451 = vmatpush1.msra.mxu0 %v1418
          %1452 = vmatprep.subr.mxu0 0.0
          %1453 = vmatpush1.msra.mxu0 %v1417
          %1454 = vmatprep.subr.mxu0 0.0
          %1455 = vmatpush1.msra.mxu0 %v1416
          %1456 = vmatprep.subr.mxu0 0.0
          %1457 = vmatpush1.msra.mxu0 %v1415
          %1458 = vmatprep.subr.mxu0 0.0
          %1459 = vmatpush1.msra.mxu0 %v1414
          %1460 = vmatprep.subr.mxu0 0.0
          %1461 = vmatpush1.msra.mxu0 %v1413
          %1462 = vmatprep.subr.mxu0 0.0
          %1463 = vmatpush1.msra.mxu0 %v1412
          %1464 = vmatprep.subr.mxu0 0.0
          %1465 = vmatpush1.msra.mxu0 %v1411
          %1466 = vmatprep.subr.mxu0 0.0
          %1467 = vmatpush2.msra.mxu0 0.0
          %1468 = vmatprep.subr.mxu0 0.0
          %1469 = vmatpush2.msra.mxu0 0.0
          %1470 = vmatprep.subr.mxu0 0.0
          %1471 = vmatpush2.msra.mxu0 0.0
          %1472 = vmatprep.subr.mxu0 0.0
          %1473 = vmatpush2.msra.mxu0 0.0
          %1474 = vmatprep.subr.mxu0 0.0
          %1475 = vmatpush2.msra.mxu0 0.0
          %1476 = vmatprep.subr.mxu0 0.0
          %1477 = vmatpush2.msra.mxu0 0.0
          %1478 = vmatprep.subr.mxu0 0.0
          %1479 = vmatpush2.msra.mxu0 0.0
          %1480 = vmatprep.subr.mxu0 0.0
          %1481 = vmatpush2.msra.mxu0 0.0
          %1482 = vmatprep.subr.mxu0 0.0
          %1483 = vmatpush2.msra.mxu0 0.0
          %1484 = vmatprep.subr.mxu0 0.0
          %1485 = vmatpush2.msra.mxu0 0.0
          %1486 = vmatprep.subr.mxu0 0.0
          %1487 = vmatpush2.msra.mxu0 0.0
          %1488 = vmatprep.subr.mxu0 0.0
          %1489 = vmatpush2.msra.mxu0 0.0
          %1490 = vmatprep.subr.mxu0 0.0
          %1491 = vmatpush2.msra.mxu0 0.0
          %1492 = vmatprep.subr.mxu0 0.0
          %1493 = vmatpush2.msra.mxu0 0.0
          %1494 = vmatprep.subr.mxu0 0.0
          %1495 = vmatpush2.msra.mxu0 0.0
          %1496 = vmatprep.subr.mxu0 0.0
          %1497 = vmatpush2.msra.mxu0 0.0
          %1498 = vmatprep.mubr.f32.mxu0 0.0
          %1499 = vmatmul.mubr.f32.gmra.mxu0 %v1395
          %v1500 = vpop.f32.mrf.mxu0
          %v1501 = vadd.f32 %v1432, %v1500
          %v1502 = vpop.f32.mrf.mxu0
          %1503 = vmatprep.mubr.f32.mxu0 0.0
          %1504 = vmatmul.mubr.f32.gmra.mxu0 %v1396
          %v1505 = vpop.f32.mrf.mxu0
          %v1506 = vadd.f32 %v1432, %v1505
          %v1507 = vpop.f32.mrf.mxu0
          %1508 = vmatprep.mubr.f32.mxu0 0.0
          %1509 = vmatmul.mubr.f32.gmra.mxu0 %v1397
          %v1510 = vpop.f32.mrf.mxu0
          %v1511 = vadd.f32 %v1432, %v1510
          %v1512 = vpop.f32.mrf.mxu0
          %1513 = vmatprep.mubr.f32.mxu0 0.0
          %1514 = vmatmul.mubr.f32.gmra.mxu0 %v1398
          %v1515 = vpop.f32.mrf.mxu0
          %v1516 = vadd.f32 %v1432, %v1515
          %v1517 = vpop.f32.mrf.mxu0
          %1518 = vmatprep.mubr.f32.mxu0 0.0
          %1519 = vmatmul.mubr.f32.gmra.mxu0 %v1399
          %v1520 = vpop.f32.mrf.mxu0
          %v1521 = vadd.f32 %v1432, %v1520
          %v1522 = vpop.f32.mrf.mxu0
          %1523 = vmatprep.mubr.f32.mxu0 0.0
          %1524 = vmatmul.mubr.f32.gmra.mxu0 %v1400
          %v1525 = vpop.f32.mrf.mxu0
          %v1526 = vadd.f32 %v1432, %v1525
          %v1527 = vpop.f32.mrf.mxu0
          %1528 = vmatprep.mubr.f32.mxu0 0.0
          %1529 = vmatmul.mubr.f32.gmra.mxu0 %v1401
          %v1530 = vpop.f32.mrf.mxu0
          %v1531 = vadd.f32 %v1432, %v1530
          %v1532 = vpop.f32.mrf.mxu0
          %1533 = vmatprep.mubr.f32.mxu0 0.0
          %1534 = vmatmul.mubr.f32.gmra.mxu0 %v1402
          %v1535 = vpop.f32.mrf.mxu0
          %v1536 = vadd.f32 %v1432, %v1535
          %v1537 = vpop.f32.mrf.mxu0
          %1538 = vmatprep.mubr.f32.mxu0 0.0
          %1539 = vmatmul.mubr.f32.gmra.mxu0 %v1403
          %v1540 = vpop.f32.mrf.mxu0
          %v1541 = vadd.f32 %v1432, %v1540
          %v1542 = vpop.f32.mrf.mxu0
          %1543 = vmatprep.mubr.f32.mxu0 0.0
          %1544 = vmatmul.mubr.f32.gmra.mxu0 %v1404
          %v1545 = vpop.f32.mrf.mxu0
          %v1546 = vadd.f32 %v1432, %v1545
          %v1547 = vpop.f32.mrf.mxu0
          %1548 = vmatprep.mubr.f32.mxu0 0.0
          %1549 = vmatmul.mubr.f32.gmra.mxu0 %v1405
          %v1550 = vpop.f32.mrf.mxu0
          %v1551 = vadd.f32 %v1432, %v1550
          %v1552 = vpop.f32.mrf.mxu0
          %1553 = vmatprep.mubr.f32.mxu0 0.0
          %1554 = vmatmul.mubr.f32.gmra.mxu0 %v1406
          %v1555 = vpop.f32.mrf.mxu0
          %v1556 = vadd.f32 %v1432, %v1555
          %v1557 = vpop.f32.mrf.mxu0
          %1558 = vmatprep.mubr.f32.mxu0 0.0
          %1559 = vmatmul.mubr.f32.gmra.mxu0 %v1407
          %v1560 = vpop.f32.mrf.mxu0
          %v1561 = vadd.f32 %v1432, %v1560
          %v1562 = vpop.f32.mrf.mxu0
          %1563 = vmatprep.mubr.f32.mxu0 0.0
          %1564 = vmatmul.mubr.f32.gmra.mxu0 %v1408
          %v1565 = vpop.f32.mrf.mxu0
          %v1566 = vadd.f32 %v1432, %v1565
          %v1567 = vpop.f32.mrf.mxu0
          %1568 = vmatprep.mubr.f32.mxu0 0.0
          %1569 = vmatmul.mubr.f32.gmra.mxu0 %v1409
          %v1570 = vpop.f32.mrf.mxu0
          %v1571 = vadd.f32 %v1432, %v1570
          %v1572 = vpop.f32.mrf.mxu0
          %1573 = vmatprep.mubr.f32.mxu0 0.0
          %1574 = vmatmul.mubr.f32.gmra.mxu0 %v1410
          %v1575 = vpop.f32.mrf.mxu0
          %v1576 = vadd.f32 %v1432, %v1575
          %v1577 = vpop.f32.mrf.mxu0
          %1578 = vdwg.mxu0
          %1579 = vst [vmem:[%s547] sm:$0xff] %v1501
          %1580 = vst [vmem:[%s547 + $0x8] sm:$0xff] %v1506
          %1581 = vst [vmem:[%s547 + $0x10] sm:$0xff] %v1511
          %1582 = vst [vmem:[%s547 + $0x18] sm:$0xff] %v1516
          %1583 = vst [vmem:[%s547 + $0x20] sm:$0xff] %v1521
          %1584 = vst [vmem:[%s547 + $0x28] sm:$0xff] %v1526
          %1585 = vst [vmem:[%s547 + $0x30] sm:$0xff] %v1531
          %1586 = vst [vmem:[%s547 + $0x38] sm:$0xff] %v1536
          %1587 = vst [vmem:[%s547 + $0x40] sm:$0xff] %v1541
          %1588 = vst [vmem:[%s547 + $0x48] sm:$0xff] %v1546
          %1589 = vst [vmem:[%s547 + $0x50] sm:$0xff] %v1551
          %1590 = vst [vmem:[%s547 + $0x58] sm:$0xff] %v1556
          %1591 = vst [vmem:[%s547 + $0x60] sm:$0xff] %v1561
          %1592 = vst [vmem:[%s547 + $0x68] sm:$0xff] %v1566
          %1593 = vst [vmem:[%s547 + $0x70] sm:$0xff] %v1571
          %1594 = vst [vmem:[%s547 + $0x78] sm:$0xff] %v1576
          %v1595 = vld [vmem:[#allocation4] sm:$0xff]
          %v1596 = vld [vmem:[#allocation4 + $0x8] sm:$0xff]
          %v1597 = vld [vmem:[#allocation4 + $0x10] sm:$0xff]
          %v1598 = vld [vmem:[#allocation4 + $0x18] sm:$0xff]
          %v1599 = vld [vmem:[#allocation4 + $0x20] sm:$0xff]
          %v1600 = vld [vmem:[#allocation4 + $0x28] sm:$0xff]
          %v1601 = vld [vmem:[#allocation4 + $0x30] sm:$0xff]
          %v1602 = vld [vmem:[#allocation4 + $0x38] sm:$0xff]
          %v1603 = vld [vmem:[#allocation4 + $0x40] sm:$0xff]
          %v1604 = vld [vmem:[#allocation4 + $0x48] sm:$0xff]
          %v1605 = vld [vmem:[#allocation4 + $0x50] sm:$0xff]
          %v1606 = vld [vmem:[#allocation4 + $0x58] sm:$0xff]
          %v1607 = vld [vmem:[#allocation4 + $0x60] sm:$0xff]
          %v1608 = vld [vmem:[#allocation4 + $0x68] sm:$0xff]
          %v1609 = vld [vmem:[#allocation4 + $0x70] sm:$0xff]
          %v1610 = vld [vmem:[#allocation4 + $0x78] sm:$0xff]
          %1611 = vst.msk [vmem:[%s570] sm:$0xff] %vm1126, %v1595
          %1612 = vst.msk [vmem:[%s570 + $0x8] sm:$0xff] %vm1126, %v1596
          %1613 = vst.msk [vmem:[%s570 + $0x10] sm:$0xff] %vm1126, %v1597
          %1614 = vst.msk [vmem:[%s570 + $0x18] sm:$0xff] %vm1126, %v1598
          %1615 = vst.msk [vmem:[%s570 + $0x20] sm:$0xff] %vm1126, %v1599
          %1616 = vst.msk [vmem:[%s570 + $0x28] sm:$0xff] %vm1126, %v1600
          %1617 = vst.msk [vmem:[%s570 + $0x30] sm:$0xff] %vm1126, %v1601
          %1618 = vst.msk [vmem:[%s570 + $0x38] sm:$0xff] %vm1126, %v1602
          %1619 = vst.msk [vmem:[%s570 + $0x40] sm:$0xff] %vm1126, %v1603
          %1620 = vst.msk [vmem:[%s570 + $0x48] sm:$0xff] %vm1126, %v1604
          %1621 = vst.msk [vmem:[%s570 + $0x50] sm:$0xff] %vm1126, %v1605
          %1622 = vst.msk [vmem:[%s570 + $0x58] sm:$0xff] %vm1126, %v1606
          %1623 = vst.msk [vmem:[%s570 + $0x60] sm:$0xff] %vm1126, %v1607
          %1624 = vst.msk [vmem:[%s570 + $0x68] sm:$0xff] %vm1126, %v1608
          %1625 = vst.msk [vmem:[%s570 + $0x70] sm:$0xff] %vm1126, %v1609
          %1626 = vst.msk [vmem:[%s570 + $0x78] sm:$0xff] %vm1126, %v1610
        $region110: #{tpu_custom_call.1} parent=89 // pred_fallthru
          _
        %s1627 = sand.u32 %s258, 1
        %s1628 = scalar_lea.sflag [#allocation8], %s1627
        %s1629 = sand.u32 %s258, 1
        %s1630 = smul.addr %s1629, 128
        %s1631 = scalar_lea.vmem [#allocation11], %s1630
        %s1632 = smul.u32 16, %s33
        %p1633 = scmp.lt.s32.totalorder %s1632, 31
        %s1634 = scalar_select %p1633, %s1632, 31
        %s1635 = smul.addr %s1634, 8
        %s1636 = scalar_lea.vmem %s10, %s1635
        // Predicated region
        $region111: #{tpu_custom_call.1} parent=89 // pred_check
          %p1637 = pneg %p268
        $region112: #{tpu_custom_call.1} parent=89 // pred_check_branch
          %1639 = sbr.rel (%p1637) target = $region114
        $region113: #{tpu_custom_call.1} parent=89 // pred_region
          %s1640 = smul.u32 16, %s33
          %s1642 = ssub.s32 2048, 2048
          %1643 = vsyncadd %s1628, %s1642
          %s1644 = smul.addr %s1640, 128
          %s1645 = scalar_lea.hbm %s9, %s1644
          %s1646 = sshll.u32 %s1631, 4
          %s1647 = int_to_ptr.vmem [resolvable:$true] %s1646
          %1652 = dma.vmem_to_hbm [thread:$0]  %s1647, 2048, %s1645, %s1628, 128, 128, 8
        $region114: #{tpu_custom_call.1} parent=89 // pred_fallthru
          _
        // Predicated region
        $region115: #{tpu_custom_call.1} parent=89 // pred_check
          %p1653 = pneg %p294
        $region116: #{tpu_custom_call.1} parent=89 // pred_check_branch
          %1655 = sbr.rel (%p1653) target = $region118
        $region117: #{tpu_custom_call.1} parent=89 // pred_region
          %s1656 = smul.u32 16, %s33
        $region118: #{tpu_custom_call.1} parent=89 // pred_fallthru
          _
      $region90: #{tpu_custom_call.1} parent=5 // pred_fallthru
        _
      %p1657 = scmp.le.s32.totalorder 2, %s24
      // Predicated region
      $region119: #{tpu_custom_call.1} parent=5 // pred_check
        %p1658 = pneg %p1657
      $region120: #{tpu_custom_call.1} parent=5 // pred_check_branch
        %1660 = sbr.rel (%p1658) target = $region122
      $region121: #{tpu_custom_call.1} parent=5 // pred_region
        %s1661 = ssub.s32 %s24, 2
        // Predicated region
        $region123: #{tpu_custom_call.1} parent=121 // pred_check
          %p1662 = pneg %p274
        $region124: #{tpu_custom_call.1} parent=121 // pred_check_branch
          %1664 = sbr.rel (%p1662) target = $region126
        $region125: #{tpu_custom_call.1} parent=121 // pred_region
          %s1665 = sand.u32 %s259, 1
          %s1666 = scalar_lea.sflag [#allocation8], %s1665
          %s1667 = sand.u32 %s259, 1
          %s1668 = smul.addr %s1667, 128
          %s1669 = scalar_lea.vmem [#allocation11], %s1668
          %1670 = dma.done %s1666, 2048
        $region126: #{tpu_custom_call.1} parent=121 // pred_fallthru
          _
        // Predicated region
        $region127: #{tpu_custom_call.1} parent=121 // pred_check
          %p1671 = pneg %p300
        $region128: #{tpu_custom_call.1} parent=121 // pred_check_branch
          %1673 = sbr.rel (%p1671) target = $region130
        $region129: #{tpu_custom_call.1} parent=121 // pred_region
          %s1674 = smul.u32 16, %s35
          %p1675 = scmp.lt.s32.totalorder %s1674, 31
          %s1676 = scalar_select %p1675, %s1674, 31
          %s1677 = smul.addr %s1676, 8
          %s1678 = scalar_lea.vmem %s10, %s1677
        $region130: #{tpu_custom_call.1} parent=121 // pred_fallthru
          _
      $region122: #{tpu_custom_call.1} parent=5 // pred_fallthru
        _
    $region6: #{tpu_custom_call.1} parent=1 // loop_footer
      %s28 = sadd.s32 1, %s24
    $region7: #{tpu_custom_call.1} parent=1 // loop_footer_branch
      %23 = sbr.rel target = $region3
    $region8: #{tpu_custom_call.1} parent=1 // loop_exit
      _
    %1679 = vsyncpa [#allocation7], 1
    %s1680 = scalar_lea.sflag [#allocation7], 1
    %1681 = vsyncpa %s1680, 1
    %1682 = vsyncpa [#allocation10], 1
    %1683 = vsyncpa [#allocation8], 1
    %s1684 = scalar_lea.sflag [#allocation8], 1
    %1685 = vsyncpa %s1684, 1

</llo_original>
